<compile_context>
chip_gen: v7x
topology: tpu7x:2x2x1
jax: 0.10.0
libtpu: 0.0.40
codegen_flags: <defaults>
</compile_context>

<pallas_src>
import numpy as np
import jax
import jax.numpy as jnp
from jax import lax
from jax.experimental import pallas as pl
from jax.experimental.pallas import tpu as pltpu


# Horizontal tap offsets that need a column mask (dx != 0), shared by wrapper
# and kernel so the mask-row indexing always agrees.
_DX_OFFSETS = (-3, -2, -1, 1, 2, 3)
_MASK_ROW = {dx: i for i, dx in enumerate(_DX_OFFSETS)}


# --------------------------------------------------------------------------- #
# Fused kernel: conv_ch_compress + relu + conv_sptial_attention + sigmoid
#               + GAP + fc1/relu/fc2/sigmoid + broadcast multiply
# --------------------------------------------------------------------------- #
def _make_kernel(h, w):
    hw = h * w

    def kernel(w1_ref, w2_ref, b_ref, masks_ref, x_ref, wfc1t_ref, wfc2_ref,
               out_ref):
        # w1_ref:    (C*9,)   SMEM   conv_ch_compress weight, layout [c][ky][kx]
        # w2_ref:    (49,)    SMEM   conv_sptial_attention weight, layout [ky][kx]
        # b_ref:     (2,)     SMEM   [conv1 bias, conv2 bias]
        # masks_ref: (6, HW)  VMEM   0/1 column masks for dx in (-3,-2,-1,1,2,3)
        # x_ref:     (C, T, HW)      one batch slab, lane dense (VMEM)
        # wfc1t_ref: (T, 16)  VMEM   fc1.weight.T
        # wfc2_ref:  (T, 16)  VMEM   fc2.weight
        # out_ref:   (T, HW)         spatial_attention * temporal_attention
        c, t, _ = x_ref.shape
        f32 = jnp.float32

        x = x_ref[...]                               # (C, T, HW)
        masks = masks_ref[...]                       # (6, HW)

        def col_mask(dx):                            # (1, HW) 0/1 f32 mask
            r = _MASK_ROW[dx]
            return masks[r:r + 1, :]

        def pad_lanes(a, pad):                       # zero halo along the lane dim
            z = jnp.zeros(a.shape[:-1] + (pad,), f32)
            return jnp.concatenate([z, a, z], axis=-1)

        # ---- conv_ch_compress: Cx3x3 -> 1, 'same' padding, + relu ------------
        # A "same" 2-D conv on the flattened (y*W + x) lane axis: a tap at
        # (dy, dx) is a flat lane shift by s = dy*W + dx with zero fill, plus a
        # column mask (depending only on dx) that kills row-wrap contributions.
        pad1 = w + 1                                  # max |dy*W + dx| for 3x3
        padded1 = {}
        for dx in (-1, 0, 1):
            xm = x if dx == 0 else x * col_mask(dx)   # pre-zero invalid columns
            padded1[dx] = pad_lanes(xm, pad1)         # (C, T, HW + 2*pad1)

        acc = jnp.zeros((t, hw), f32)
        for ci in range(c):                           # small C: fully unrolled
            base = ci * 9
            for kx in range(3):
                dx = kx - 1
                xc = padded1[dx][ci]                  # (T, HW + 2*pad1)
                for ky in range(3):
                    dy = ky - 1
                    s = dy * w + dx
                    acc = acc + xc[:, pad1 + s:pad1 + s + hw] * w1_ref[base + ky * 3 + kx]
        y1 = jnp.maximum(acc + b_ref[0], 0.0)         # (T, HW)

        # ---- conv_sptial_attention: 1x7x7, 'same' padding, + sigmoid ----------
        pad2 = 3 * w + 3                              # max |dy*W + dx| for 7x7
        padded2 = {}
        for dx in range(-3, 4):
            ym = y1 if dx == 0 else y1 * col_mask(dx)
            padded2[dx] = pad_lanes(ym, pad2)         # (T, HW + 2*pad2)

        acc2 = jnp.zeros((t, hw), f32)
        for kx in range(7):
            dx = kx - 3
            yc = padded2[dx]
            for ky in range(7):
                dy = ky - 3
                s = dy * w + dx
                acc2 = acc2 + yc[:, pad2 + s:pad2 + s + hw] * w2_ref[ky * 7 + kx]
        sa = jax.nn.sigmoid(acc2 + b_ref[1])          # (T, HW) spatial attention

        # ---- GAP over (H, W) + fc1 -> relu -> fc2 -> sigmoid ------------------
        pooled = jnp.sum(sa, axis=1, keepdims=True) * (1.0 / float(hw))   # (T, 1)
        # hdn[o] = relu( sum_k fc1.weight[o, k] * pooled[k] )  (wfc1t = fc1.weight.T)
        hdn = jnp.maximum(
            jnp.sum(wfc1t_ref[...] * pooled, axis=0, keepdims=True), 0.0)  # (1, 16)
        # ta[t] = sigmoid( sum_o fc2.weight[t, o] * hdn[o] )
        ta = jax.nn.sigmoid(
            jnp.sum(wfc2_ref[...] * hdn, axis=1, keepdims=True))           # (T, 1)

        # ---- final broadcast multiply, single lane-dense store ----------------
        out_ref[...] = sa * ta

    return kernel


# --------------------------------------------------------------------------- #
# Wrapper
# --------------------------------------------------------------------------- #
def spatial_temporal_attention(x, params):
    """x: (bs, c, t, h, w) float32.  Returns (bs, 1, t, h, w)."""
    w1, b1, w2, b2, wfc1, wfc2 = params
    bs, c, t, h, w = x.shape
    assert t == 16, "fc1 has in_features=16, so the temporal dim t must be 16"
    hw = h * w

    w1_flat = w1.reshape(-1).astype(jnp.float32)                     # (c*9,) [c][ky][kx]
    w2_flat = w2.reshape(-1).astype(jnp.float32)                     # (49,)  [ky][kx]
    biases = jnp.concatenate([b1.reshape(1), b2.reshape(1)]).astype(jnp.float32)
    wfc1_t = wfc1.T.astype(jnp.float32)                              # (t, 16) = fc1.weight.T
    wfc2_m = wfc2.astype(jnp.float32)                                # (t, 16) = fc2.weight

    # 0/1 column masks for each nonzero horizontal tap offset dx (numpy constants).
    cols = np.arange(hw) % w
    mask_rows = []
    for dx in _DX_OFFSETS:
        if dx > 0:
            m = cols >= dx
        else:
            m = cols < (w + dx)
        mask_rows.append(m.astype(np.float32))
    masks = jnp.asarray(np.stack(mask_rows))                         # (6, hw)

    x_flat = x.astype(jnp.float32).reshape(bs, c, t, hw)             # lane-dense layout

    out_flat = pl.pallas_call(
        _make_kernel(h, w),
        out_shape=jax.ShapeDtypeStruct((bs, t, hw), jnp.float32),
        grid=(bs,),
        in_specs=[
            pl.BlockSpec(memory_space=pltpu.MemorySpace.SMEM),        # w1 (flat)
            pl.BlockSpec(memory_space=pltpu.MemorySpace.SMEM),        # w2 (flat)
            pl.BlockSpec(memory_space=pltpu.MemorySpace.SMEM),        # biases
            pl.BlockSpec((6, hw), lambda b: (0, 0)),                  # column masks
            pl.BlockSpec((None, c, t, hw), lambda b: (b, 0, 0, 0)),   # x slab
            pl.BlockSpec((t, 16), lambda b: (0, 0)),                  # fc1.weight.T
            pl.BlockSpec((t, 16), lambda b: (0, 0)),                  # fc2.weight
        ],
        out_specs=pl.BlockSpec((None, t, hw), lambda b: (b, 0, 0)),
        compiler_params=pltpu.CompilerParams(
            dimension_semantics=("parallel",)),
    )(w1_flat, w2_flat, biases, masks, x_flat, wfc1_t, wfc2_m)

    # Free row-major reshape back to the module's output layout.
    return out_flat.reshape(bs, 1, t, h, w)


# --------------------------------------------------------------------------- #
# Pure-JAX reference (for correctness check only)
# --------------------------------------------------------------------------- #
def reference(x, w1, b1, w2, b2, wfc1, wfc2):
    bs, c, t, h, w = x.shape
    hp = lax.Precision.HIGHEST
    xr = jnp.transpose(x, (0, 2, 1, 3, 4)).reshape(bs * t, c, h, w)
    y = lax.conv_general_dilated(
        xr, w1.reshape(1, c, 3, 3), (1, 1), "SAME",
        dimension_numbers=("NCHW", "OIHW", "NCHW"), precision=hp) + b1[0]
    y = jnp.maximum(y, 0.0)
    y2 = lax.conv_general_dilated(
        y, w2.reshape(1, 1, 7, 7), (1, 1), "SAME",
        dimension_numbers=("NCHW", "OIHW", "NCHW"), precision=hp) + b2[0]
    sa = jax.nn.sigmoid(y2).reshape(bs, t, h, w)
    pooled = sa.mean(axis=(2, 3))
    hdn = jnp.maximum(jnp.dot(pooled, wfc1.T, precision=hp), 0.0)
    ta = jax.nn.sigmoid(jnp.dot(hdn, wfc2.T, precision=hp))
    return (sa * ta[:, :, None, None]).reshape(bs, 1, t, h, w)


if __name__ == "__main__":
    # t must be 16 because fc1 has in_features=16 in the original module.
    bs, c, t, h, w = 2, 4, 16, 8, 8

    key = jax.random.PRNGKey(0)
    ks = jax.random.split(key, 7)
    x = jax.random.normal(ks[0], (bs, c, t, h, w), jnp.float32)
    # Deterministic synthetic parameters (Conv3d / Linear shapes from __init__).
    w1 = jax.random.normal(ks[1], (1, c, 1, 3, 3), jnp.float32) * 0.1    # conv_ch_compress.weight
    b1 = jax.random.normal(ks[2], (1,), jnp.float32) * 0.1               # conv_ch_compress.bias
    w2 = jax.random.normal(ks[3], (1, 1, 1, 7, 7), jnp.float32) * 0.1    # conv_sptial_attention.weight
    b2 = jax.random.normal(ks[4], (1,), jnp.float32) * 0.1               # conv_sptial_attention.bias
    wfc1 = jax.random.normal(ks[5], (16, 16), jnp.float32) * 0.1         # fc1.weight (no bias)
    wfc2 = jax.random.normal(ks[6], (16, 16), jnp.float32) * 0.1         # fc2.weight (no bias)
    params = (w1, b1, w2, b2, wfc1, wfc2)

    out = jax.jit(spatial_temporal_attention)(x, params)
    out = jax.block_until_ready(out)

    ref = reference(x, *params)
    assert out.shape == (bs, 1, t, h, w), out.shape
    max_err = float(jnp.max(jnp.abs(out - ref)))
    assert jnp.allclose(out, ref, atol=1e-4, rtol=1e-4), max_err

    print("KERNEL_OK")
</pallas_src>

<mosaic_0001>
module attributes {stable_mosaic.version = 11 : i64} {
  func.func @kernel(%arg0: i32, %arg1: memref<36xf32, #tpu.memory_space<smem>>, %arg2: memref<49xf32, #tpu.memory_space<smem>>, %arg3: memref<2xf32, #tpu.memory_space<smem>>, %arg4: memref<6x64xf32, #tpu.memory_space<vmem>>, %arg5: memref<1x4x16x64xf32, #tpu.memory_space<vmem>>, %arg6: memref<16x16xf32, #tpu.memory_space<vmem>>, %arg7: memref<16x16xf32, #tpu.memory_space<vmem>>, %arg8: memref<1x16x64xf32, #tpu.memory_space<vmem>>) attributes {dimension_semantics = [#tpu.dimension_semantics<parallel>], iteration_bounds = array<i64: 2>, scalar_prefetch = 0 : i64, scratch_operands = 0 : i64, tpu.core_type = #tpu.core_type<tc>, window_params = [{transform_indices = @transform_0, window_bounds = array<i64: 36>}, {transform_indices = @transform_1, window_bounds = array<i64: 49>}, {transform_indices = @transform_2, window_bounds = array<i64: 2>}, {pipeline_mode = #tpu.pipeline_mode<synchronous>, transform_indices = @transform_3, window_bounds = array<i64: 6, 64>}, {transform_indices = @transform_4, window_bounds = array<i64: 1, 4, 16, 64>}, {pipeline_mode = #tpu.pipeline_mode<synchronous>, transform_indices = @transform_5, window_bounds = array<i64: 16, 16>}, {pipeline_mode = #tpu.pipeline_mode<synchronous>, transform_indices = @transform_6, window_bounds = array<i64: 16, 16>}, {transform_indices = @transform_7, window_bounds = array<i64: 1, 16, 64>}]} {
    %c0 = arith.constant 0 : index
    %c0_0 = arith.constant 0 : index
    %c0_1 = arith.constant 0 : index
    %c0_2 = arith.constant 0 : index
    %0 = vector.load %arg5[%c0, %c0_0, %c0_1, %c0_2] : memref<1x4x16x64xf32, #tpu.memory_space<vmem>>, vector<1x4x16x64xf32>
    %1 = vector.shape_cast %0 : vector<1x4x16x64xf32> to vector<4x16x64xf32>
    %c0_3 = arith.constant 0 : index
    %c0_4 = arith.constant 0 : index
    %2 = vector.load %arg4[%c0_3, %c0_4] : memref<6x64xf32, #tpu.memory_space<vmem>>, vector<6x64xf32>
    %3 = vector.extract_strided_slice %2 {offsets = [2, 0], sizes = [1, 64], strides = [1, 1]} : vector<6x64xf32> to vector<1x64xf32>
    %4 = vector.shape_cast %3 : vector<1x64xf32> to vector<1x1x64xf32>
    %5 = vector.broadcast %4 : vector<1x1x64xf32> to vector<4x16x64xf32>
    %6 = arith.mulf %1, %5 : vector<4x16x64xf32>
    %cst = arith.constant 0.000000e+00 : f32
    %7 = vector.broadcast %cst : f32 to vector<4x16x9xf32>
    %8 = tpu.concatenate %7, %6, %7 in 2 : vector<4x16x9xf32>, vector<4x16x64xf32>, vector<4x16x9xf32> -> vector<4x16x82xf32>
    %cst_5 = arith.constant 0.000000e+00 : f32
    %9 = vector.broadcast %cst_5 : f32 to vector<4x16x9xf32>
    %10 = tpu.concatenate %9, %1, %9 in 2 : vector<4x16x9xf32>, vector<4x16x64xf32>, vector<4x16x9xf32> -> vector<4x16x82xf32>
    %11 = vector.extract_strided_slice %2 {offsets = [3, 0], sizes = [1, 64], strides = [1, 1]} : vector<6x64xf32> to vector<1x64xf32>
    %12 = vector.shape_cast %11 : vector<1x64xf32> to vector<1x1x64xf32>
    %13 = vector.broadcast %12 : vector<1x1x64xf32> to vector<4x16x64xf32>
    %14 = arith.mulf %1, %13 : vector<4x16x64xf32>
    %cst_6 = arith.constant 0.000000e+00 : f32
    %15 = vector.broadcast %cst_6 : f32 to vector<4x16x9xf32>
    %16 = tpu.concatenate %15, %14, %15 in 2 : vector<4x16x9xf32>, vector<4x16x64xf32>, vector<4x16x9xf32> -> vector<4x16x82xf32>
    %cst_7 = arith.constant 0.000000e+00 : f32
    %17 = vector.broadcast %cst_7 : f32 to vector<16x64xf32>
    %18 = vector.extract_strided_slice %8 {offsets = [0, 0, 0], sizes = [1, 16, 82], strides = [1, 1, 1]} : vector<4x16x82xf32> to vector<1x16x82xf32>
    %19 = vector.shape_cast %18 : vector<1x16x82xf32> to vector<16x82xf32>
    %20 = vector.extract_strided_slice %19 {offsets = [0, 0], sizes = [16, 64], strides = [1, 1]} : vector<16x82xf32> to vector<16x64xf32>
    %c0_8 = arith.constant 0 : index
    %21 = memref.load %arg1[%c0_8] : memref<36xf32, #tpu.memory_space<smem>>
    %22 = vector.broadcast %21 : f32 to vector<16x64xf32>
    %23 = arith.mulf %20, %22 : vector<16x64xf32>
    %24 = arith.addf %17, %23 : vector<16x64xf32>
    %25 = vector.extract_strided_slice %19 {offsets = [0, 8], sizes = [16, 64], strides = [1, 1]} : vector<16x82xf32> to vector<16x64xf32>
    %c3 = arith.constant 3 : index
    %26 = memref.load %arg1[%c3] : memref<36xf32, #tpu.memory_space<smem>>
    %27 = vector.broadcast %26 : f32 to vector<16x64xf32>
    %28 = arith.mulf %25, %27 : vector<16x64xf32>
    %29 = arith.addf %24, %28 : vector<16x64xf32>
    %30 = vector.extract_strided_slice %19 {offsets = [0, 16], sizes = [16, 64], strides = [1, 1]} : vector<16x82xf32> to vector<16x64xf32>
    %c6 = arith.constant 6 : index
    %31 = memref.load %arg1[%c6] : memref<36xf32, #tpu.memory_space<smem>>
    %32 = vector.broadcast %31 : f32 to vector<16x64xf32>
    %33 = arith.mulf %30, %32 : vector<16x64xf32>
    %34 = arith.addf %29, %33 : vector<16x64xf32>
    %35 = vector.extract_strided_slice %10 {offsets = [0, 0, 0], sizes = [1, 16, 82], strides = [1, 1, 1]} : vector<4x16x82xf32> to vector<1x16x82xf32>
    %36 = vector.shape_cast %35 : vector<1x16x82xf32> to vector<16x82xf32>
    %37 = vector.extract_strided_slice %36 {offsets = [0, 1], sizes = [16, 64], strides = [1, 1]} : vector<16x82xf32> to vector<16x64xf32>
    %c1 = arith.constant 1 : index
    %38 = memref.load %arg1[%c1] : memref<36xf32, #tpu.memory_space<smem>>
    %39 = vector.broadcast %38 : f32 to vector<16x64xf32>
    %40 = arith.mulf %37, %39 : vector<16x64xf32>
    %41 = arith.addf %34, %40 : vector<16x64xf32>
    %42 = vector.extract_strided_slice %36 {offsets = [0, 9], sizes = [16, 64], strides = [1, 1]} : vector<16x82xf32> to vector<16x64xf32>
    %c4 = arith.constant 4 : index
    %43 = memref.load %arg1[%c4] : memref<36xf32, #tpu.memory_space<smem>>
    %44 = vector.broadcast %43 : f32 to vector<16x64xf32>
    %45 = arith.mulf %42, %44 : vector<16x64xf32>
    %46 = arith.addf %41, %45 : vector<16x64xf32>
    %47 = vector.extract_strided_slice %36 {offsets = [0, 17], sizes = [16, 64], strides = [1, 1]} : vector<16x82xf32> to vector<16x64xf32>
    %c7 = arith.constant 7 : index
    %48 = memref.load %arg1[%c7] : memref<36xf32, #tpu.memory_space<smem>>
    %49 = vector.broadcast %48 : f32 to vector<16x64xf32>
    %50 = arith.mulf %47, %49 : vector<16x64xf32>
    %51 = arith.addf %46, %50 : vector<16x64xf32>
    %52 = vector.extract_strided_slice %16 {offsets = [0, 0, 0], sizes = [1, 16, 82], strides = [1, 1, 1]} : vector<4x16x82xf32> to vector<1x16x82xf32>
    %53 = vector.shape_cast %52 : vector<1x16x82xf32> to vector<16x82xf32>
    %54 = vector.extract_strided_slice %53 {offsets = [0, 2], sizes = [16, 64], strides = [1, 1]} : vector<16x82xf32> to vector<16x64xf32>
    %c2 = arith.constant 2 : index
    %55 = memref.load %arg1[%c2] : memref<36xf32, #tpu.memory_space<smem>>
    %56 = vector.broadcast %55 : f32 to vector<16x64xf32>
    %57 = arith.mulf %54, %56 : vector<16x64xf32>
    %58 = arith.addf %51, %57 : vector<16x64xf32>
    %59 = vector.extract_strided_slice %53 {offsets = [0, 10], sizes = [16, 64], strides = [1, 1]} : vector<16x82xf32> to vector<16x64xf32>
    %c5 = arith.constant 5 : index
    %60 = memref.load %arg1[%c5] : memref<36xf32, #tpu.memory_space<smem>>
    %61 = vector.broadcast %60 : f32 to vector<16x64xf32>
    %62 = arith.mulf %59, %61 : vector<16x64xf32>
    %63 = arith.addf %58, %62 : vector<16x64xf32>
    %64 = vector.extract_strided_slice %53 {offsets = [0, 18], sizes = [16, 64], strides = [1, 1]} : vector<16x82xf32> to vector<16x64xf32>
    %c8 = arith.constant 8 : index
    %65 = memref.load %arg1[%c8] : memref<36xf32, #tpu.memory_space<smem>>
    %66 = vector.broadcast %65 : f32 to vector<16x64xf32>
    %67 = arith.mulf %64, %66 : vector<16x64xf32>
    %68 = arith.addf %63, %67 : vector<16x64xf32>
    %69 = vector.extract_strided_slice %8 {offsets = [1, 0, 0], sizes = [1, 16, 82], strides = [1, 1, 1]} : vector<4x16x82xf32> to vector<1x16x82xf32>
    %70 = vector.shape_cast %69 : vector<1x16x82xf32> to vector<16x82xf32>
    %71 = vector.extract_strided_slice %70 {offsets = [0, 0], sizes = [16, 64], strides = [1, 1]} : vector<16x82xf32> to vector<16x64xf32>
    %c9 = arith.constant 9 : index
    %72 = memref.load %arg1[%c9] : memref<36xf32, #tpu.memory_space<smem>>
    %73 = vector.broadcast %72 : f32 to vector<16x64xf32>
    %74 = arith.mulf %71, %73 : vector<16x64xf32>
    %75 = arith.addf %68, %74 : vector<16x64xf32>
    %76 = vector.extract_strided_slice %70 {offsets = [0, 8], sizes = [16, 64], strides = [1, 1]} : vector<16x82xf32> to vector<16x64xf32>
    %c12 = arith.constant 12 : index
    %77 = memref.load %arg1[%c12] : memref<36xf32, #tpu.memory_space<smem>>
    %78 = vector.broadcast %77 : f32 to vector<16x64xf32>
    %79 = arith.mulf %76, %78 : vector<16x64xf32>
    %80 = arith.addf %75, %79 : vector<16x64xf32>
    %81 = vector.extract_strided_slice %70 {offsets = [0, 16], sizes = [16, 64], strides = [1, 1]} : vector<16x82xf32> to vector<16x64xf32>
    %c15 = arith.constant 15 : index
    %82 = memref.load %arg1[%c15] : memref<36xf32, #tpu.memory_space<smem>>
    %83 = vector.broadcast %82 : f32 to vector<16x64xf32>
    %84 = arith.mulf %81, %83 : vector<16x64xf32>
    %85 = arith.addf %80, %84 : vector<16x64xf32>
    %86 = vector.extract_strided_slice %10 {offsets = [1, 0, 0], sizes = [1, 16, 82], strides = [1, 1, 1]} : vector<4x16x82xf32> to vector<1x16x82xf32>
    %87 = vector.shape_cast %86 : vector<1x16x82xf32> to vector<16x82xf32>
    %88 = vector.extract_strided_slice %87 {offsets = [0, 1], sizes = [16, 64], strides = [1, 1]} : vector<16x82xf32> to vector<16x64xf32>
    %c10 = arith.constant 10 : index
    %89 = memref.load %arg1[%c10] : memref<36xf32, #tpu.memory_space<smem>>
    %90 = vector.broadcast %89 : f32 to vector<16x64xf32>
    %91 = arith.mulf %88, %90 : vector<16x64xf32>
    %92 = arith.addf %85, %91 : vector<16x64xf32>
    %93 = vector.extract_strided_slice %87 {offsets = [0, 9], sizes = [16, 64], strides = [1, 1]} : vector<16x82xf32> to vector<16x64xf32>
    %c13 = arith.constant 13 : index
    %94 = memref.load %arg1[%c13] : memref<36xf32, #tpu.memory_space<smem>>
    %95 = vector.broadcast %94 : f32 to vector<16x64xf32>
    %96 = arith.mulf %93, %95 : vector<16x64xf32>
    %97 = arith.addf %92, %96 : vector<16x64xf32>
    %98 = vector.extract_strided_slice %87 {offsets = [0, 17], sizes = [16, 64], strides = [1, 1]} : vector<16x82xf32> to vector<16x64xf32>
    %c16 = arith.constant 16 : index
    %99 = memref.load %arg1[%c16] : memref<36xf32, #tpu.memory_space<smem>>
    %100 = vector.broadcast %99 : f32 to vector<16x64xf32>
    %101 = arith.mulf %98, %100 : vector<16x64xf32>
    %102 = arith.addf %97, %101 : vector<16x64xf32>
    %103 = vector.extract_strided_slice %16 {offsets = [1, 0, 0], sizes = [1, 16, 82], strides = [1, 1, 1]} : vector<4x16x82xf32> to vector<1x16x82xf32>
    %104 = vector.shape_cast %103 : vector<1x16x82xf32> to vector<16x82xf32>
    %105 = vector.extract_strided_slice %104 {offsets = [0, 2], sizes = [16, 64], strides = [1, 1]} : vector<16x82xf32> to vector<16x64xf32>
    %c11 = arith.constant 11 : index
    %106 = memref.load %arg1[%c11] : memref<36xf32, #tpu.memory_space<smem>>
    %107 = vector.broadcast %106 : f32 to vector<16x64xf32>
    %108 = arith.mulf %105, %107 : vector<16x64xf32>
    %109 = arith.addf %102, %108 : vector<16x64xf32>
    %110 = vector.extract_strided_slice %104 {offsets = [0, 10], sizes = [16, 64], strides = [1, 1]} : vector<16x82xf32> to vector<16x64xf32>
    %c14 = arith.constant 14 : index
    %111 = memref.load %arg1[%c14] : memref<36xf32, #tpu.memory_space<smem>>
    %112 = vector.broadcast %111 : f32 to vector<16x64xf32>
    %113 = arith.mulf %110, %112 : vector<16x64xf32>
    %114 = arith.addf %109, %113 : vector<16x64xf32>
    %115 = vector.extract_strided_slice %104 {offsets = [0, 18], sizes = [16, 64], strides = [1, 1]} : vector<16x82xf32> to vector<16x64xf32>
    %c17 = arith.constant 17 : index
    %116 = memref.load %arg1[%c17] : memref<36xf32, #tpu.memory_space<smem>>
    %117 = vector.broadcast %116 : f32 to vector<16x64xf32>
    %118 = arith.mulf %115, %117 : vector<16x64xf32>
    %119 = arith.addf %114, %118 : vector<16x64xf32>
    %120 = vector.extract_strided_slice %8 {offsets = [2, 0, 0], sizes = [1, 16, 82], strides = [1, 1, 1]} : vector<4x16x82xf32> to vector<1x16x82xf32>
    %121 = vector.shape_cast %120 : vector<1x16x82xf32> to vector<16x82xf32>
    %122 = vector.extract_strided_slice %121 {offsets = [0, 0], sizes = [16, 64], strides = [1, 1]} : vector<16x82xf32> to vector<16x64xf32>
    %c18 = arith.constant 18 : index
    %123 = memref.load %arg1[%c18] : memref<36xf32, #tpu.memory_space<smem>>
    %124 = vector.broadcast %123 : f32 to vector<16x64xf32>
    %125 = arith.mulf %122, %124 : vector<16x64xf32>
    %126 = arith.addf %119, %125 : vector<16x64xf32>
    %127 = vector.extract_strided_slice %121 {offsets = [0, 8], sizes = [16, 64], strides = [1, 1]} : vector<16x82xf32> to vector<16x64xf32>
    %c21 = arith.constant 21 : index
    %128 = memref.load %arg1[%c21] : memref<36xf32, #tpu.memory_space<smem>>
    %129 = vector.broadcast %128 : f32 to vector<16x64xf32>
    %130 = arith.mulf %127, %129 : vector<16x64xf32>
    %131 = arith.addf %126, %130 : vector<16x64xf32>
    %132 = vector.extract_strided_slice %121 {offsets = [0, 16], sizes = [16, 64], strides = [1, 1]} : vector<16x82xf32> to vector<16x64xf32>
    %c24 = arith.constant 24 : index
    %133 = memref.load %arg1[%c24] : memref<36xf32, #tpu.memory_space<smem>>
    %134 = vector.broadcast %133 : f32 to vector<16x64xf32>
    %135 = arith.mulf %132, %134 : vector<16x64xf32>
    %136 = arith.addf %131, %135 : vector<16x64xf32>
    %137 = vector.extract_strided_slice %10 {offsets = [2, 0, 0], sizes = [1, 16, 82], strides = [1, 1, 1]} : vector<4x16x82xf32> to vector<1x16x82xf32>
    %138 = vector.shape_cast %137 : vector<1x16x82xf32> to vector<16x82xf32>
    %139 = vector.extract_strided_slice %138 {offsets = [0, 1], sizes = [16, 64], strides = [1, 1]} : vector<16x82xf32> to vector<16x64xf32>
    %c19 = arith.constant 19 : index
    %140 = memref.load %arg1[%c19] : memref<36xf32, #tpu.memory_space<smem>>
    %141 = vector.broadcast %140 : f32 to vector<16x64xf32>
    %142 = arith.mulf %139, %141 : vector<16x64xf32>
    %143 = arith.addf %136, %142 : vector<16x64xf32>
    %144 = vector.extract_strided_slice %138 {offsets = [0, 9], sizes = [16, 64], strides = [1, 1]} : vector<16x82xf32> to vector<16x64xf32>
    %c22 = arith.constant 22 : index
    %145 = memref.load %arg1[%c22] : memref<36xf32, #tpu.memory_space<smem>>
    %146 = vector.broadcast %145 : f32 to vector<16x64xf32>
    %147 = arith.mulf %144, %146 : vector<16x64xf32>
    %148 = arith.addf %143, %147 : vector<16x64xf32>
    %149 = vector.extract_strided_slice %138 {offsets = [0, 17], sizes = [16, 64], strides = [1, 1]} : vector<16x82xf32> to vector<16x64xf32>
    %c25 = arith.constant 25 : index
    %150 = memref.load %arg1[%c25] : memref<36xf32, #tpu.memory_space<smem>>
    %151 = vector.broadcast %150 : f32 to vector<16x64xf32>
    %152 = arith.mulf %149, %151 : vector<16x64xf32>
    %153 = arith.addf %148, %152 : vector<16x64xf32>
    %154 = vector.extract_strided_slice %16 {offsets = [2, 0, 0], sizes = [1, 16, 82], strides = [1, 1, 1]} : vector<4x16x82xf32> to vector<1x16x82xf32>
    %155 = vector.shape_cast %154 : vector<1x16x82xf32> to vector<16x82xf32>
    %156 = vector.extract_strided_slice %155 {offsets = [0, 2], sizes = [16, 64], strides = [1, 1]} : vector<16x82xf32> to vector<16x64xf32>
    %c20 = arith.constant 20 : index
    %157 = memref.load %arg1[%c20] : memref<36xf32, #tpu.memory_space<smem>>
    %158 = vector.broadcast %157 : f32 to vector<16x64xf32>
    %159 = arith.mulf %156, %158 : vector<16x64xf32>
    %160 = arith.addf %153, %159 : vector<16x64xf32>
    %161 = vector.extract_strided_slice %155 {offsets = [0, 10], sizes = [16, 64], strides = [1, 1]} : vector<16x82xf32> to vector<16x64xf32>
    %c23 = arith.constant 23 : index
    %162 = memref.load %arg1[%c23] : memref<36xf32, #tpu.memory_space<smem>>
    %163 = vector.broadcast %162 : f32 to vector<16x64xf32>
    %164 = arith.mulf %161, %163 : vector<16x64xf32>
    %165 = arith.addf %160, %164 : vector<16x64xf32>
    %166 = vector.extract_strided_slice %155 {offsets = [0, 18], sizes = [16, 64], strides = [1, 1]} : vector<16x82xf32> to vector<16x64xf32>
    %c26 = arith.constant 26 : index
    %167 = memref.load %arg1[%c26] : memref<36xf32, #tpu.memory_space<smem>>
    %168 = vector.broadcast %167 : f32 to vector<16x64xf32>
    %169 = arith.mulf %166, %168 : vector<16x64xf32>
    %170 = arith.addf %165, %169 : vector<16x64xf32>
    %171 = vector.extract_strided_slice %8 {offsets = [3, 0, 0], sizes = [1, 16, 82], strides = [1, 1, 1]} : vector<4x16x82xf32> to vector<1x16x82xf32>
    %172 = vector.shape_cast %171 : vector<1x16x82xf32> to vector<16x82xf32>
    %173 = vector.extract_strided_slice %172 {offsets = [0, 0], sizes = [16, 64], strides = [1, 1]} : vector<16x82xf32> to vector<16x64xf32>
    %c27 = arith.constant 27 : index
    %174 = memref.load %arg1[%c27] : memref<36xf32, #tpu.memory_space<smem>>
    %175 = vector.broadcast %174 : f32 to vector<16x64xf32>
    %176 = arith.mulf %173, %175 : vector<16x64xf32>
    %177 = arith.addf %170, %176 : vector<16x64xf32>
    %178 = vector.extract_strided_slice %172 {offsets = [0, 8], sizes = [16, 64], strides = [1, 1]} : vector<16x82xf32> to vector<16x64xf32>
    %c30 = arith.constant 30 : index
    %179 = memref.load %arg1[%c30] : memref<36xf32, #tpu.memory_space<smem>>
    %180 = vector.broadcast %179 : f32 to vector<16x64xf32>
    %181 = arith.mulf %178, %180 : vector<16x64xf32>
    %182 = arith.addf %177, %181 : vector<16x64xf32>
    %183 = vector.extract_strided_slice %172 {offsets = [0, 16], sizes = [16, 64], strides = [1, 1]} : vector<16x82xf32> to vector<16x64xf32>
    %c33 = arith.constant 33 : index
    %184 = memref.load %arg1[%c33] : memref<36xf32, #tpu.memory_space<smem>>
    %185 = vector.broadcast %184 : f32 to vector<16x64xf32>
    %186 = arith.mulf %183, %185 : vector<16x64xf32>
    %187 = arith.addf %182, %186 : vector<16x64xf32>
    %188 = vector.extract_strided_slice %10 {offsets = [3, 0, 0], sizes = [1, 16, 82], strides = [1, 1, 1]} : vector<4x16x82xf32> to vector<1x16x82xf32>
    %189 = vector.shape_cast %188 : vector<1x16x82xf32> to vector<16x82xf32>
    %190 = vector.extract_strided_slice %189 {offsets = [0, 1], sizes = [16, 64], strides = [1, 1]} : vector<16x82xf32> to vector<16x64xf32>
    %c28 = arith.constant 28 : index
    %191 = memref.load %arg1[%c28] : memref<36xf32, #tpu.memory_space<smem>>
    %192 = vector.broadcast %191 : f32 to vector<16x64xf32>
    %193 = arith.mulf %190, %192 : vector<16x64xf32>
    %194 = arith.addf %187, %193 : vector<16x64xf32>
    %195 = vector.extract_strided_slice %189 {offsets = [0, 9], sizes = [16, 64], strides = [1, 1]} : vector<16x82xf32> to vector<16x64xf32>
    %c31 = arith.constant 31 : index
    %196 = memref.load %arg1[%c31] : memref<36xf32, #tpu.memory_space<smem>>
    %197 = vector.broadcast %196 : f32 to vector<16x64xf32>
    %198 = arith.mulf %195, %197 : vector<16x64xf32>
    %199 = arith.addf %194, %198 : vector<16x64xf32>
    %200 = vector.extract_strided_slice %189 {offsets = [0, 17], sizes = [16, 64], strides = [1, 1]} : vector<16x82xf32> to vector<16x64xf32>
    %c34 = arith.constant 34 : index
    %201 = memref.load %arg1[%c34] : memref<36xf32, #tpu.memory_space<smem>>
    %202 = vector.broadcast %201 : f32 to vector<16x64xf32>
    %203 = arith.mulf %200, %202 : vector<16x64xf32>
    %204 = arith.addf %199, %203 : vector<16x64xf32>
    %205 = vector.extract_strided_slice %16 {offsets = [3, 0, 0], sizes = [1, 16, 82], strides = [1, 1, 1]} : vector<4x16x82xf32> to vector<1x16x82xf32>
    %206 = vector.shape_cast %205 : vector<1x16x82xf32> to vector<16x82xf32>
    %207 = vector.extract_strided_slice %206 {offsets = [0, 2], sizes = [16, 64], strides = [1, 1]} : vector<16x82xf32> to vector<16x64xf32>
    %c29 = arith.constant 29 : index
    %208 = memref.load %arg1[%c29] : memref<36xf32, #tpu.memory_space<smem>>
    %209 = vector.broadcast %208 : f32 to vector<16x64xf32>
    %210 = arith.mulf %207, %209 : vector<16x64xf32>
    %211 = arith.addf %204, %210 : vector<16x64xf32>
    %212 = vector.extract_strided_slice %206 {offsets = [0, 10], sizes = [16, 64], strides = [1, 1]} : vector<16x82xf32> to vector<16x64xf32>
    %c32 = arith.constant 32 : index
    %213 = memref.load %arg1[%c32] : memref<36xf32, #tpu.memory_space<smem>>
    %214 = vector.broadcast %213 : f32 to vector<16x64xf32>
    %215 = arith.mulf %212, %214 : vector<16x64xf32>
    %216 = arith.addf %211, %215 : vector<16x64xf32>
    %217 = vector.extract_strided_slice %206 {offsets = [0, 18], sizes = [16, 64], strides = [1, 1]} : vector<16x82xf32> to vector<16x64xf32>
    %c35 = arith.constant 35 : index
    %218 = memref.load %arg1[%c35] : memref<36xf32, #tpu.memory_space<smem>>
    %219 = vector.broadcast %218 : f32 to vector<16x64xf32>
    %220 = arith.mulf %217, %219 : vector<16x64xf32>
    %221 = arith.addf %216, %220 : vector<16x64xf32>
    %c0_9 = arith.constant 0 : index
    %222 = memref.load %arg3[%c0_9] : memref<2xf32, #tpu.memory_space<smem>>
    %223 = vector.broadcast %222 : f32 to vector<16x64xf32>
    %224 = arith.addf %221, %223 : vector<16x64xf32>
    %cst_10 = arith.constant 0.000000e+00 : f32
    %225 = vector.broadcast %cst_10 : f32 to vector<16x64xf32>
    %226 = arith.maximumf %224, %225 : vector<16x64xf32>
    %227 = vector.extract_strided_slice %2 {offsets = [0, 0], sizes = [1, 64], strides = [1, 1]} : vector<6x64xf32> to vector<1x64xf32>
    %228 = vector.broadcast %227 : vector<1x64xf32> to vector<16x64xf32>
    %229 = arith.mulf %226, %228 : vector<16x64xf32>
    %cst_11 = arith.constant 0.000000e+00 : f32
    %230 = vector.broadcast %cst_11 : f32 to vector<16x27xf32>
    %231 = tpu.concatenate %230, %229, %230 in 1 : vector<16x27xf32>, vector<16x64xf32>, vector<16x27xf32> -> vector<16x118xf32>
    %232 = vector.extract_strided_slice %2 {offsets = [1, 0], sizes = [1, 64], strides = [1, 1]} : vector<6x64xf32> to vector<1x64xf32>
    %233 = vector.broadcast %232 : vector<1x64xf32> to vector<16x64xf32>
    %234 = arith.mulf %226, %233 : vector<16x64xf32>
    %cst_12 = arith.constant 0.000000e+00 : f32
    %235 = vector.broadcast %cst_12 : f32 to vector<16x27xf32>
    %236 = tpu.concatenate %235, %234, %235 in 1 : vector<16x27xf32>, vector<16x64xf32>, vector<16x27xf32> -> vector<16x118xf32>
    %237 = vector.extract_strided_slice %2 {offsets = [2, 0], sizes = [1, 64], strides = [1, 1]} : vector<6x64xf32> to vector<1x64xf32>
    %238 = vector.broadcast %237 : vector<1x64xf32> to vector<16x64xf32>
    %239 = arith.mulf %226, %238 : vector<16x64xf32>
    %cst_13 = arith.constant 0.000000e+00 : f32
    %240 = vector.broadcast %cst_13 : f32 to vector<16x27xf32>
    %241 = tpu.concatenate %240, %239, %240 in 1 : vector<16x27xf32>, vector<16x64xf32>, vector<16x27xf32> -> vector<16x118xf32>
    %cst_14 = arith.constant 0.000000e+00 : f32
    %242 = vector.broadcast %cst_14 : f32 to vector<16x27xf32>
    %243 = tpu.concatenate %242, %226, %242 in 1 : vector<16x27xf32>, vector<16x64xf32>, vector<16x27xf32> -> vector<16x118xf32>
    %244 = vector.extract_strided_slice %2 {offsets = [3, 0], sizes = [1, 64], strides = [1, 1]} : vector<6x64xf32> to vector<1x64xf32>
    %245 = vector.broadcast %244 : vector<1x64xf32> to vector<16x64xf32>
    %246 = arith.mulf %226, %245 : vector<16x64xf32>
    %cst_15 = arith.constant 0.000000e+00 : f32
    %247 = vector.broadcast %cst_15 : f32 to vector<16x27xf32>
    %248 = tpu.concatenate %247, %246, %247 in 1 : vector<16x27xf32>, vector<16x64xf32>, vector<16x27xf32> -> vector<16x118xf32>
    %249 = vector.extract_strided_slice %2 {offsets = [4, 0], sizes = [1, 64], strides = [1, 1]} : vector<6x64xf32> to vector<1x64xf32>
    %250 = vector.broadcast %249 : vector<1x64xf32> to vector<16x64xf32>
    %251 = arith.mulf %226, %250 : vector<16x64xf32>
    %cst_16 = arith.constant 0.000000e+00 : f32
    %252 = vector.broadcast %cst_16 : f32 to vector<16x27xf32>
    %253 = tpu.concatenate %252, %251, %252 in 1 : vector<16x27xf32>, vector<16x64xf32>, vector<16x27xf32> -> vector<16x118xf32>
    %254 = vector.extract_strided_slice %2 {offsets = [5, 0], sizes = [1, 64], strides = [1, 1]} : vector<6x64xf32> to vector<1x64xf32>
    %255 = vector.broadcast %254 : vector<1x64xf32> to vector<16x64xf32>
    %256 = arith.mulf %226, %255 : vector<16x64xf32>
    %cst_17 = arith.constant 0.000000e+00 : f32
    %257 = vector.broadcast %cst_17 : f32 to vector<16x27xf32>
    %258 = tpu.concatenate %257, %256, %257 in 1 : vector<16x27xf32>, vector<16x64xf32>, vector<16x27xf32> -> vector<16x118xf32>
    %cst_18 = arith.constant 0.000000e+00 : f32
    %259 = vector.broadcast %cst_18 : f32 to vector<16x64xf32>
    %260 = vector.extract_strided_slice %231 {offsets = [0, 0], sizes = [16, 64], strides = [1, 1]} : vector<16x118xf32> to vector<16x64xf32>
    %c0_19 = arith.constant 0 : index
    %261 = memref.load %arg2[%c0_19] : memref<49xf32, #tpu.memory_space<smem>>
    %262 = vector.broadcast %261 : f32 to vector<16x64xf32>
    %263 = arith.mulf %260, %262 : vector<16x64xf32>
    %264 = arith.addf %259, %263 : vector<16x64xf32>
    %265 = vector.extract_strided_slice %231 {offsets = [0, 8], sizes = [16, 64], strides = [1, 1]} : vector<16x118xf32> to vector<16x64xf32>
    %c7_20 = arith.constant 7 : index
    %266 = memref.load %arg2[%c7_20] : memref<49xf32, #tpu.memory_space<smem>>
    %267 = vector.broadcast %266 : f32 to vector<16x64xf32>
    %268 = arith.mulf %265, %267 : vector<16x64xf32>
    %269 = arith.addf %264, %268 : vector<16x64xf32>
    %270 = vector.extract_strided_slice %231 {offsets = [0, 16], sizes = [16, 64], strides = [1, 1]} : vector<16x118xf32> to vector<16x64xf32>
    %c14_21 = arith.constant 14 : index
    %271 = memref.load %arg2[%c14_21] : memref<49xf32, #tpu.memory_space<smem>>
    %272 = vector.broadcast %271 : f32 to vector<16x64xf32>
    %273 = arith.mulf %270, %272 : vector<16x64xf32>
    %274 = arith.addf %269, %273 : vector<16x64xf32>
    %275 = vector.extract_strided_slice %231 {offsets = [0, 24], sizes = [16, 64], strides = [1, 1]} : vector<16x118xf32> to vector<16x64xf32>
    %c21_22 = arith.constant 21 : index
    %276 = memref.load %arg2[%c21_22] : memref<49xf32, #tpu.memory_space<smem>>
    %277 = vector.broadcast %276 : f32 to vector<16x64xf32>
    %278 = arith.mulf %275, %277 : vector<16x64xf32>
    %279 = arith.addf %274, %278 : vector<16x64xf32>
    %280 = vector.extract_strided_slice %231 {offsets = [0, 32], sizes = [16, 64], strides = [1, 1]} : vector<16x118xf32> to vector<16x64xf32>
    %c28_23 = arith.constant 28 : index
    %281 = memref.load %arg2[%c28_23] : memref<49xf32, #tpu.memory_space<smem>>
    %282 = vector.broadcast %281 : f32 to vector<16x64xf32>
    %283 = arith.mulf %280, %282 : vector<16x64xf32>
    %284 = arith.addf %279, %283 : vector<16x64xf32>
    %285 = vector.extract_strided_slice %231 {offsets = [0, 40], sizes = [16, 64], strides = [1, 1]} : vector<16x118xf32> to vector<16x64xf32>
    %c35_24 = arith.constant 35 : index
    %286 = memref.load %arg2[%c35_24] : memref<49xf32, #tpu.memory_space<smem>>
    %287 = vector.broadcast %286 : f32 to vector<16x64xf32>
    %288 = arith.mulf %285, %287 : vector<16x64xf32>
    %289 = arith.addf %284, %288 : vector<16x64xf32>
    %290 = vector.extract_strided_slice %231 {offsets = [0, 48], sizes = [16, 64], strides = [1, 1]} : vector<16x118xf32> to vector<16x64xf32>
    %c42 = arith.constant 42 : index
    %291 = memref.load %arg2[%c42] : memref<49xf32, #tpu.memory_space<smem>>
    %292 = vector.broadcast %291 : f32 to vector<16x64xf32>
    %293 = arith.mulf %290, %292 : vector<16x64xf32>
    %294 = arith.addf %289, %293 : vector<16x64xf32>
    %295 = vector.extract_strided_slice %236 {offsets = [0, 1], sizes = [16, 64], strides = [1, 1]} : vector<16x118xf32> to vector<16x64xf32>
    %c1_25 = arith.constant 1 : index
    %296 = memref.load %arg2[%c1_25] : memref<49xf32, #tpu.memory_space<smem>>
    %297 = vector.broadcast %296 : f32 to vector<16x64xf32>
    %298 = arith.mulf %295, %297 : vector<16x64xf32>
    %299 = arith.addf %294, %298 : vector<16x64xf32>
    %300 = vector.extract_strided_slice %236 {offsets = [0, 9], sizes = [16, 64], strides = [1, 1]} : vector<16x118xf32> to vector<16x64xf32>
    %c8_26 = arith.constant 8 : index
    %301 = memref.load %arg2[%c8_26] : memref<49xf32, #tpu.memory_space<smem>>
    %302 = vector.broadcast %301 : f32 to vector<16x64xf32>
    %303 = arith.mulf %300, %302 : vector<16x64xf32>
    %304 = arith.addf %299, %303 : vector<16x64xf32>
    %305 = vector.extract_strided_slice %236 {offsets = [0, 17], sizes = [16, 64], strides = [1, 1]} : vector<16x118xf32> to vector<16x64xf32>
    %c15_27 = arith.constant 15 : index
    %306 = memref.load %arg2[%c15_27] : memref<49xf32, #tpu.memory_space<smem>>
    %307 = vector.broadcast %306 : f32 to vector<16x64xf32>
    %308 = arith.mulf %305, %307 : vector<16x64xf32>
    %309 = arith.addf %304, %308 : vector<16x64xf32>
    %310 = vector.extract_strided_slice %236 {offsets = [0, 25], sizes = [16, 64], strides = [1, 1]} : vector<16x118xf32> to vector<16x64xf32>
    %c22_28 = arith.constant 22 : index
    %311 = memref.load %arg2[%c22_28] : memref<49xf32, #tpu.memory_space<smem>>
    %312 = vector.broadcast %311 : f32 to vector<16x64xf32>
    %313 = arith.mulf %310, %312 : vector<16x64xf32>
    %314 = arith.addf %309, %313 : vector<16x64xf32>
    %315 = vector.extract_strided_slice %236 {offsets = [0, 33], sizes = [16, 64], strides = [1, 1]} : vector<16x118xf32> to vector<16x64xf32>
    %c29_29 = arith.constant 29 : index
    %316 = memref.load %arg2[%c29_29] : memref<49xf32, #tpu.memory_space<smem>>
    %317 = vector.broadcast %316 : f32 to vector<16x64xf32>
    %318 = arith.mulf %315, %317 : vector<16x64xf32>
    %319 = arith.addf %314, %318 : vector<16x64xf32>
    %320 = vector.extract_strided_slice %236 {offsets = [0, 41], sizes = [16, 64], strides = [1, 1]} : vector<16x118xf32> to vector<16x64xf32>
    %c36 = arith.constant 36 : index
    %321 = memref.load %arg2[%c36] : memref<49xf32, #tpu.memory_space<smem>>
    %322 = vector.broadcast %321 : f32 to vector<16x64xf32>
    %323 = arith.mulf %320, %322 : vector<16x64xf32>
    %324 = arith.addf %319, %323 : vector<16x64xf32>
    %325 = vector.extract_strided_slice %236 {offsets = [0, 49], sizes = [16, 64], strides = [1, 1]} : vector<16x118xf32> to vector<16x64xf32>
    %c43 = arith.constant 43 : index
    %326 = memref.load %arg2[%c43] : memref<49xf32, #tpu.memory_space<smem>>
    %327 = vector.broadcast %326 : f32 to vector<16x64xf32>
    %328 = arith.mulf %325, %327 : vector<16x64xf32>
    %329 = arith.addf %324, %328 : vector<16x64xf32>
    %330 = vector.extract_strided_slice %241 {offsets = [0, 2], sizes = [16, 64], strides = [1, 1]} : vector<16x118xf32> to vector<16x64xf32>
    %c2_30 = arith.constant 2 : index
    %331 = memref.load %arg2[%c2_30] : memref<49xf32, #tpu.memory_space<smem>>
    %332 = vector.broadcast %331 : f32 to vector<16x64xf32>
    %333 = arith.mulf %330, %332 : vector<16x64xf32>
    %334 = arith.addf %329, %333 : vector<16x64xf32>
    %335 = vector.extract_strided_slice %241 {offsets = [0, 10], sizes = [16, 64], strides = [1, 1]} : vector<16x118xf32> to vector<16x64xf32>
    %c9_31 = arith.constant 9 : index
    %336 = memref.load %arg2[%c9_31] : memref<49xf32, #tpu.memory_space<smem>>
    %337 = vector.broadcast %336 : f32 to vector<16x64xf32>
    %338 = arith.mulf %335, %337 : vector<16x64xf32>
    %339 = arith.addf %334, %338 : vector<16x64xf32>
    %340 = vector.extract_strided_slice %241 {offsets = [0, 18], sizes = [16, 64], strides = [1, 1]} : vector<16x118xf32> to vector<16x64xf32>
    %c16_32 = arith.constant 16 : index
    %341 = memref.load %arg2[%c16_32] : memref<49xf32, #tpu.memory_space<smem>>
    %342 = vector.broadcast %341 : f32 to vector<16x64xf32>
    %343 = arith.mulf %340, %342 : vector<16x64xf32>
    %344 = arith.addf %339, %343 : vector<16x64xf32>
    %345 = vector.extract_strided_slice %241 {offsets = [0, 26], sizes = [16, 64], strides = [1, 1]} : vector<16x118xf32> to vector<16x64xf32>
    %c23_33 = arith.constant 23 : index
    %346 = memref.load %arg2[%c23_33] : memref<49xf32, #tpu.memory_space<smem>>
    %347 = vector.broadcast %346 : f32 to vector<16x64xf32>
    %348 = arith.mulf %345, %347 : vector<16x64xf32>
    %349 = arith.addf %344, %348 : vector<16x64xf32>
    %350 = vector.extract_strided_slice %241 {offsets = [0, 34], sizes = [16, 64], strides = [1, 1]} : vector<16x118xf32> to vector<16x64xf32>
    %c30_34 = arith.constant 30 : index
    %351 = memref.load %arg2[%c30_34] : memref<49xf32, #tpu.memory_space<smem>>
    %352 = vector.broadcast %351 : f32 to vector<16x64xf32>
    %353 = arith.mulf %350, %352 : vector<16x64xf32>
    %354 = arith.addf %349, %353 : vector<16x64xf32>
    %355 = vector.extract_strided_slice %241 {offsets = [0, 42], sizes = [16, 64], strides = [1, 1]} : vector<16x118xf32> to vector<16x64xf32>
    %c37 = arith.constant 37 : index
    %356 = memref.load %arg2[%c37] : memref<49xf32, #tpu.memory_space<smem>>
    %357 = vector.broadcast %356 : f32 to vector<16x64xf32>
    %358 = arith.mulf %355, %357 : vector<16x64xf32>
    %359 = arith.addf %354, %358 : vector<16x64xf32>
    %360 = vector.extract_strided_slice %241 {offsets = [0, 50], sizes = [16, 64], strides = [1, 1]} : vector<16x118xf32> to vector<16x64xf32>
    %c44 = arith.constant 44 : index
    %361 = memref.load %arg2[%c44] : memref<49xf32, #tpu.memory_space<smem>>
    %362 = vector.broadcast %361 : f32 to vector<16x64xf32>
    %363 = arith.mulf %360, %362 : vector<16x64xf32>
    %364 = arith.addf %359, %363 : vector<16x64xf32>
    %365 = vector.extract_strided_slice %243 {offsets = [0, 3], sizes = [16, 64], strides = [1, 1]} : vector<16x118xf32> to vector<16x64xf32>
    %c3_35 = arith.constant 3 : index
    %366 = memref.load %arg2[%c3_35] : memref<49xf32, #tpu.memory_space<smem>>
    %367 = vector.broadcast %366 : f32 to vector<16x64xf32>
    %368 = arith.mulf %365, %367 : vector<16x64xf32>
    %369 = arith.addf %364, %368 : vector<16x64xf32>
    %370 = vector.extract_strided_slice %243 {offsets = [0, 11], sizes = [16, 64], strides = [1, 1]} : vector<16x118xf32> to vector<16x64xf32>
    %c10_36 = arith.constant 10 : index
    %371 = memref.load %arg2[%c10_36] : memref<49xf32, #tpu.memory_space<smem>>
    %372 = vector.broadcast %371 : f32 to vector<16x64xf32>
    %373 = arith.mulf %370, %372 : vector<16x64xf32>
    %374 = arith.addf %369, %373 : vector<16x64xf32>
    %375 = vector.extract_strided_slice %243 {offsets = [0, 19], sizes = [16, 64], strides = [1, 1]} : vector<16x118xf32> to vector<16x64xf32>
    %c17_37 = arith.constant 17 : index
    %376 = memref.load %arg2[%c17_37] : memref<49xf32, #tpu.memory_space<smem>>
    %377 = vector.broadcast %376 : f32 to vector<16x64xf32>
    %378 = arith.mulf %375, %377 : vector<16x64xf32>
    %379 = arith.addf %374, %378 : vector<16x64xf32>
    %380 = vector.extract_strided_slice %243 {offsets = [0, 27], sizes = [16, 64], strides = [1, 1]} : vector<16x118xf32> to vector<16x64xf32>
    %c24_38 = arith.constant 24 : index
    %381 = memref.load %arg2[%c24_38] : memref<49xf32, #tpu.memory_space<smem>>
    %382 = vector.broadcast %381 : f32 to vector<16x64xf32>
    %383 = arith.mulf %380, %382 : vector<16x64xf32>
    %384 = arith.addf %379, %383 : vector<16x64xf32>
    %385 = vector.extract_strided_slice %243 {offsets = [0, 35], sizes = [16, 64], strides = [1, 1]} : vector<16x118xf32> to vector<16x64xf32>
    %c31_39 = arith.constant 31 : index
    %386 = memref.load %arg2[%c31_39] : memref<49xf32, #tpu.memory_space<smem>>
    %387 = vector.broadcast %386 : f32 to vector<16x64xf32>
    %388 = arith.mulf %385, %387 : vector<16x64xf32>
    %389 = arith.addf %384, %388 : vector<16x64xf32>
    %390 = vector.extract_strided_slice %243 {offsets = [0, 43], sizes = [16, 64], strides = [1, 1]} : vector<16x118xf32> to vector<16x64xf32>
    %c38 = arith.constant 38 : index
    %391 = memref.load %arg2[%c38] : memref<49xf32, #tpu.memory_space<smem>>
    %392 = vector.broadcast %391 : f32 to vector<16x64xf32>
    %393 = arith.mulf %390, %392 : vector<16x64xf32>
    %394 = arith.addf %389, %393 : vector<16x64xf32>
    %395 = vector.extract_strided_slice %243 {offsets = [0, 51], sizes = [16, 64], strides = [1, 1]} : vector<16x118xf32> to vector<16x64xf32>
    %c45 = arith.constant 45 : index
    %396 = memref.load %arg2[%c45] : memref<49xf32, #tpu.memory_space<smem>>
    %397 = vector.broadcast %396 : f32 to vector<16x64xf32>
    %398 = arith.mulf %395, %397 : vector<16x64xf32>
    %399 = arith.addf %394, %398 : vector<16x64xf32>
    %400 = vector.extract_strided_slice %248 {offsets = [0, 4], sizes = [16, 64], strides = [1, 1]} : vector<16x118xf32> to vector<16x64xf32>
    %c4_40 = arith.constant 4 : index
    %401 = memref.load %arg2[%c4_40] : memref<49xf32, #tpu.memory_space<smem>>
    %402 = vector.broadcast %401 : f32 to vector<16x64xf32>
    %403 = arith.mulf %400, %402 : vector<16x64xf32>
    %404 = arith.addf %399, %403 : vector<16x64xf32>
    %405 = vector.extract_strided_slice %248 {offsets = [0, 12], sizes = [16, 64], strides = [1, 1]} : vector<16x118xf32> to vector<16x64xf32>
    %c11_41 = arith.constant 11 : index
    %406 = memref.load %arg2[%c11_41] : memref<49xf32, #tpu.memory_space<smem>>
    %407 = vector.broadcast %406 : f32 to vector<16x64xf32>
    %408 = arith.mulf %405, %407 : vector<16x64xf32>
    %409 = arith.addf %404, %408 : vector<16x64xf32>
    %410 = vector.extract_strided_slice %248 {offsets = [0, 20], sizes = [16, 64], strides = [1, 1]} : vector<16x118xf32> to vector<16x64xf32>
    %c18_42 = arith.constant 18 : index
    %411 = memref.load %arg2[%c18_42] : memref<49xf32, #tpu.memory_space<smem>>
    %412 = vector.broadcast %411 : f32 to vector<16x64xf32>
    %413 = arith.mulf %410, %412 : vector<16x64xf32>
    %414 = arith.addf %409, %413 : vector<16x64xf32>
    %415 = vector.extract_strided_slice %248 {offsets = [0, 28], sizes = [16, 64], strides = [1, 1]} : vector<16x118xf32> to vector<16x64xf32>
    %c25_43 = arith.constant 25 : index
    %416 = memref.load %arg2[%c25_43] : memref<49xf32, #tpu.memory_space<smem>>
    %417 = vector.broadcast %416 : f32 to vector<16x64xf32>
    %418 = arith.mulf %415, %417 : vector<16x64xf32>
    %419 = arith.addf %414, %418 : vector<16x64xf32>
    %420 = vector.extract_strided_slice %248 {offsets = [0, 36], sizes = [16, 64], strides = [1, 1]} : vector<16x118xf32> to vector<16x64xf32>
    %c32_44 = arith.constant 32 : index
    %421 = memref.load %arg2[%c32_44] : memref<49xf32, #tpu.memory_space<smem>>
    %422 = vector.broadcast %421 : f32 to vector<16x64xf32>
    %423 = arith.mulf %420, %422 : vector<16x64xf32>
    %424 = arith.addf %419, %423 : vector<16x64xf32>
    %425 = vector.extract_strided_slice %248 {offsets = [0, 44], sizes = [16, 64], strides = [1, 1]} : vector<16x118xf32> to vector<16x64xf32>
    %c39 = arith.constant 39 : index
    %426 = memref.load %arg2[%c39] : memref<49xf32, #tpu.memory_space<smem>>
    %427 = vector.broadcast %426 : f32 to vector<16x64xf32>
    %428 = arith.mulf %425, %427 : vector<16x64xf32>
    %429 = arith.addf %424, %428 : vector<16x64xf32>
    %430 = vector.extract_strided_slice %248 {offsets = [0, 52], sizes = [16, 64], strides = [1, 1]} : vector<16x118xf32> to vector<16x64xf32>
    %c46 = arith.constant 46 : index
    %431 = memref.load %arg2[%c46] : memref<49xf32, #tpu.memory_space<smem>>
    %432 = vector.broadcast %431 : f32 to vector<16x64xf32>
    %433 = arith.mulf %430, %432 : vector<16x64xf32>
    %434 = arith.addf %429, %433 : vector<16x64xf32>
    %435 = vector.extract_strided_slice %253 {offsets = [0, 5], sizes = [16, 64], strides = [1, 1]} : vector<16x118xf32> to vector<16x64xf32>
    %c5_45 = arith.constant 5 : index
    %436 = memref.load %arg2[%c5_45] : memref<49xf32, #tpu.memory_space<smem>>
    %437 = vector.broadcast %436 : f32 to vector<16x64xf32>
    %438 = arith.mulf %435, %437 : vector<16x64xf32>
    %439 = arith.addf %434, %438 : vector<16x64xf32>
    %440 = vector.extract_strided_slice %253 {offsets = [0, 13], sizes = [16, 64], strides = [1, 1]} : vector<16x118xf32> to vector<16x64xf32>
    %c12_46 = arith.constant 12 : index
    %441 = memref.load %arg2[%c12_46] : memref<49xf32, #tpu.memory_space<smem>>
    %442 = vector.broadcast %441 : f32 to vector<16x64xf32>
    %443 = arith.mulf %440, %442 : vector<16x64xf32>
    %444 = arith.addf %439, %443 : vector<16x64xf32>
    %445 = vector.extract_strided_slice %253 {offsets = [0, 21], sizes = [16, 64], strides = [1, 1]} : vector<16x118xf32> to vector<16x64xf32>
    %c19_47 = arith.constant 19 : index
    %446 = memref.load %arg2[%c19_47] : memref<49xf32, #tpu.memory_space<smem>>
    %447 = vector.broadcast %446 : f32 to vector<16x64xf32>
    %448 = arith.mulf %445, %447 : vector<16x64xf32>
    %449 = arith.addf %444, %448 : vector<16x64xf32>
    %450 = vector.extract_strided_slice %253 {offsets = [0, 29], sizes = [16, 64], strides = [1, 1]} : vector<16x118xf32> to vector<16x64xf32>
    %c26_48 = arith.constant 26 : index
    %451 = memref.load %arg2[%c26_48] : memref<49xf32, #tpu.memory_space<smem>>
    %452 = vector.broadcast %451 : f32 to vector<16x64xf32>
    %453 = arith.mulf %450, %452 : vector<16x64xf32>
    %454 = arith.addf %449, %453 : vector<16x64xf32>
    %455 = vector.extract_strided_slice %253 {offsets = [0, 37], sizes = [16, 64], strides = [1, 1]} : vector<16x118xf32> to vector<16x64xf32>
    %c33_49 = arith.constant 33 : index
    %456 = memref.load %arg2[%c33_49] : memref<49xf32, #tpu.memory_space<smem>>
    %457 = vector.broadcast %456 : f32 to vector<16x64xf32>
    %458 = arith.mulf %455, %457 : vector<16x64xf32>
    %459 = arith.addf %454, %458 : vector<16x64xf32>
    %460 = vector.extract_strided_slice %253 {offsets = [0, 45], sizes = [16, 64], strides = [1, 1]} : vector<16x118xf32> to vector<16x64xf32>
    %c40 = arith.constant 40 : index
    %461 = memref.load %arg2[%c40] : memref<49xf32, #tpu.memory_space<smem>>
    %462 = vector.broadcast %461 : f32 to vector<16x64xf32>
    %463 = arith.mulf %460, %462 : vector<16x64xf32>
    %464 = arith.addf %459, %463 : vector<16x64xf32>
    %465 = vector.extract_strided_slice %253 {offsets = [0, 53], sizes = [16, 64], strides = [1, 1]} : vector<16x118xf32> to vector<16x64xf32>
    %c47 = arith.constant 47 : index
    %466 = memref.load %arg2[%c47] : memref<49xf32, #tpu.memory_space<smem>>
    %467 = vector.broadcast %466 : f32 to vector<16x64xf32>
    %468 = arith.mulf %465, %467 : vector<16x64xf32>
    %469 = arith.addf %464, %468 : vector<16x64xf32>
    %470 = vector.extract_strided_slice %258 {offsets = [0, 6], sizes = [16, 64], strides = [1, 1]} : vector<16x118xf32> to vector<16x64xf32>
    %c6_50 = arith.constant 6 : index
    %471 = memref.load %arg2[%c6_50] : memref<49xf32, #tpu.memory_space<smem>>
    %472 = vector.broadcast %471 : f32 to vector<16x64xf32>
    %473 = arith.mulf %470, %472 : vector<16x64xf32>
    %474 = arith.addf %469, %473 : vector<16x64xf32>
    %475 = vector.extract_strided_slice %258 {offsets = [0, 14], sizes = [16, 64], strides = [1, 1]} : vector<16x118xf32> to vector<16x64xf32>
    %c13_51 = arith.constant 13 : index
    %476 = memref.load %arg2[%c13_51] : memref<49xf32, #tpu.memory_space<smem>>
    %477 = vector.broadcast %476 : f32 to vector<16x64xf32>
    %478 = arith.mulf %475, %477 : vector<16x64xf32>
    %479 = arith.addf %474, %478 : vector<16x64xf32>
    %480 = vector.extract_strided_slice %258 {offsets = [0, 22], sizes = [16, 64], strides = [1, 1]} : vector<16x118xf32> to vector<16x64xf32>
    %c20_52 = arith.constant 20 : index
    %481 = memref.load %arg2[%c20_52] : memref<49xf32, #tpu.memory_space<smem>>
    %482 = vector.broadcast %481 : f32 to vector<16x64xf32>
    %483 = arith.mulf %480, %482 : vector<16x64xf32>
    %484 = arith.addf %479, %483 : vector<16x64xf32>
    %485 = vector.extract_strided_slice %258 {offsets = [0, 30], sizes = [16, 64], strides = [1, 1]} : vector<16x118xf32> to vector<16x64xf32>
    %c27_53 = arith.constant 27 : index
    %486 = memref.load %arg2[%c27_53] : memref<49xf32, #tpu.memory_space<smem>>
    %487 = vector.broadcast %486 : f32 to vector<16x64xf32>
    %488 = arith.mulf %485, %487 : vector<16x64xf32>
    %489 = arith.addf %484, %488 : vector<16x64xf32>
    %490 = vector.extract_strided_slice %258 {offsets = [0, 38], sizes = [16, 64], strides = [1, 1]} : vector<16x118xf32> to vector<16x64xf32>
    %c34_54 = arith.constant 34 : index
    %491 = memref.load %arg2[%c34_54] : memref<49xf32, #tpu.memory_space<smem>>
    %492 = vector.broadcast %491 : f32 to vector<16x64xf32>
    %493 = arith.mulf %490, %492 : vector<16x64xf32>
    %494 = arith.addf %489, %493 : vector<16x64xf32>
    %495 = vector.extract_strided_slice %258 {offsets = [0, 46], sizes = [16, 64], strides = [1, 1]} : vector<16x118xf32> to vector<16x64xf32>
    %c41 = arith.constant 41 : index
    %496 = memref.load %arg2[%c41] : memref<49xf32, #tpu.memory_space<smem>>
    %497 = vector.broadcast %496 : f32 to vector<16x64xf32>
    %498 = arith.mulf %495, %497 : vector<16x64xf32>
    %499 = arith.addf %494, %498 : vector<16x64xf32>
    %500 = vector.extract_strided_slice %258 {offsets = [0, 54], sizes = [16, 64], strides = [1, 1]} : vector<16x118xf32> to vector<16x64xf32>
    %c48 = arith.constant 48 : index
    %501 = memref.load %arg2[%c48] : memref<49xf32, #tpu.memory_space<smem>>
    %502 = vector.broadcast %501 : f32 to vector<16x64xf32>
    %503 = arith.mulf %500, %502 : vector<16x64xf32>
    %504 = arith.addf %499, %503 : vector<16x64xf32>
    %c1_55 = arith.constant 1 : index
    %505 = memref.load %arg3[%c1_55] : memref<2xf32, #tpu.memory_space<smem>>
    %506 = vector.broadcast %505 : f32 to vector<16x64xf32>
    %507 = arith.addf %504, %506 : vector<16x64xf32>
    %508 = arith.negf %507 : vector<16x64xf32>
    %509 = math.exp %508 : vector<16x64xf32>
    %cst_56 = arith.constant 1.000000e+00 : f32
    %510 = vector.broadcast %cst_56 : f32 to vector<16x64xf32>
    %511 = arith.addf %510, %509 : vector<16x64xf32>
    %512 = arith.divf %510, %511 : vector<16x64xf32>
    %cst_57 = arith.constant dense<0.000000e+00> : vector<16xf32>
    %513 = vector.multi_reduction <add>, %512, %cst_57 [1] : vector<16x64xf32> to vector<16xf32>
    %514 = vector.shape_cast %513 : vector<16xf32> to vector<16x1xf32>
    %cst_58 = arith.constant 1.562500e-02 : f32
    %515 = vector.broadcast %cst_58 : f32 to vector<16x1xf32>
    %516 = arith.mulf %514, %515 : vector<16x1xf32>
    %c0_59 = arith.constant 0 : index
    %c0_60 = arith.constant 0 : index
    %517 = vector.load %arg6[%c0_59, %c0_60] : memref<16x16xf32, #tpu.memory_space<vmem>>, vector<16x16xf32>
    %518 = vector.broadcast %516 : vector<16x1xf32> to vector<16x16xf32>
    %519 = arith.mulf %517, %518 : vector<16x16xf32>
    %cst_61 = arith.constant dense<0.000000e+00> : vector<16xf32>
    %520 = vector.multi_reduction <add>, %519, %cst_61 [0] : vector<16x16xf32> to vector<16xf32>
    %521 = vector.shape_cast %520 : vector<16xf32> to vector<1x16xf32>
    %cst_62 = arith.constant 0.000000e+00 : f32
    %522 = vector.broadcast %cst_62 : f32 to vector<1x16xf32>
    %523 = arith.maximumf %521, %522 : vector<1x16xf32>
    %c0_63 = arith.constant 0 : index
    %c0_64 = arith.constant 0 : index
    %524 = vector.load %arg7[%c0_63, %c0_64] : memref<16x16xf32, #tpu.memory_space<vmem>>, vector<16x16xf32>
    %525 = vector.broadcast %523 : vector<1x16xf32> to vector<16x16xf32>
    %526 = arith.mulf %524, %525 : vector<16x16xf32>
    %cst_65 = arith.constant dense<0.000000e+00> : vector<16xf32>
    %527 = vector.multi_reduction <add>, %526, %cst_65 [1] : vector<16x16xf32> to vector<16xf32>
    %528 = vector.shape_cast %527 : vector<16xf32> to vector<16x1xf32>
    %529 = arith.negf %528 : vector<16x1xf32>
    %530 = math.exp %529 : vector<16x1xf32>
    %cst_66 = arith.constant 1.000000e+00 : f32
    %531 = vector.broadcast %cst_66 : f32 to vector<16x1xf32>
    %532 = arith.addf %531, %530 : vector<16x1xf32>
    %533 = arith.divf %531, %532 : vector<16x1xf32>
    %534 = vector.broadcast %533 : vector<16x1xf32> to vector<16x64xf32>
    %535 = arith.mulf %512, %534 : vector<16x64xf32>
    %c0_67 = arith.constant 0 : index
    %c0_68 = arith.constant 0 : index
    %c0_69 = arith.constant 0 : index
    %536 = vector.load %arg8[%c0_67, %c0_68, %c0_69] : memref<1x16x64xf32, #tpu.memory_space<vmem>>, vector<1x16x64xf32>
    %537 = vector.shape_cast %536 : vector<1x16x64xf32> to vector<16x64xf32>
    %538 = vector.shape_cast %535 : vector<16x64xf32> to vector<1x16x64xf32>
    tpu.vector_store %arg8[%c0_67, %c0_68, %c0_69], %538 {strides = array<i32>} : memref<1x16x64xf32, #tpu.memory_space<vmem>>, vector<1x16x64xf32>,
    return
  }
  func.func @transform_0(%arg0: i32) -> i32 {
    %c0_i32 = arith.constant 0 : i32
    %c0_i32_0 = arith.constant 0 : i32
    return %c0_i32 : i32
  }
  func.func @transform_1(%arg0: i32) -> i32 {
    %c0_i32 = arith.constant 0 : i32
    %c0_i32_0 = arith.constant 0 : i32
    return %c0_i32 : i32
  }
  func.func @transform_2(%arg0: i32) -> i32 {
    %c0_i32 = arith.constant 0 : i32
    %c0_i32_0 = arith.constant 0 : i32
    return %c0_i32 : i32
  }
  func.func @transform_3(%arg0: i32) -> (i32, i32) {
    %c0_i32 = arith.constant 0 : i32
    %c0_i32_0 = arith.constant 0 : i32
    %c0_i32_1 = arith.constant 0 : i32
    return %c0_i32, %c0_i32_0 : i32, i32
  }
  func.func @transform_4(%arg0: i32) -> (i32, i32, i32, i32) {
    %c0_i32 = arith.constant 0 : i32
    %c0_i32_0 = arith.constant 0 : i32
    %c0_i32_1 = arith.constant 0 : i32
    %c0_i32_2 = arith.constant 0 : i32
    return %arg0, %c0_i32, %c0_i32_0, %c0_i32_1 : i32, i32, i32, i32
  }
  func.func @transform_5(%arg0: i32) -> (i32, i32) {
    %c0_i32 = arith.constant 0 : i32
    %c0_i32_0 = arith.constant 0 : i32
    %c0_i32_1 = arith.constant 0 : i32
    return %c0_i32, %c0_i32_0 : i32, i32
  }
  func.func @transform_6(%arg0: i32) -> (i32, i32) {
    %c0_i32 = arith.constant 0 : i32
    %c0_i32_0 = arith.constant 0 : i32
    %c0_i32_1 = arith.constant 0 : i32
    return %c0_i32, %c0_i32_0 : i32, i32
  }
  func.func @transform_7(%arg0: i32) -> (i32, i32, i32) {
    %c0_i32 = arith.constant 0 : i32
    %c0_i32_0 = arith.constant 0 : i32
    %c0_i32_1 = arith.constant 0 : i32
    return %arg0, %c0_i32, %c0_i32_0 : i32, i32, i32
  }
}

</mosaic_0001>

<llo_original>
// kernel: spatial_temporal_attention.1
$region0: #{spatial_temporal_attention.1}
  #allocation0 [shape = 'u32[]', space=smem, size = 0x4, offset = 0x4, fixed_abs, tag = 'smem constant byte address 0x4 - core index']
  #allocation1 [shape = 'u32[144,128]{1,0:T(1,128)}', space=vmem, size = 0x12000, scoped, tag = 'internal scratch']
  %s0 = inlined_call_operand.vmem [shape: f32[36], index: 0, kind: input, shape index: {}]
  %s1 = inlined_call_operand.vmem [shape: f32[49], index: 1, kind: input, shape index: {}]
  %s2 = inlined_call_operand.vmem [shape: f32[2], index: 2, kind: input, shape index: {}]
  %s3 = inlined_call_operand.vmem [shape: f32[6,64], index: 3, kind: input, shape index: {}]
  %s4 = inlined_call_operand.vmem [shape: f32[2,4,16,64], index: 4, kind: input, shape index: {}]
  %s5 = inlined_call_operand.vmem [shape: f32[16,16], index: 5, kind: input, shape index: {}]
  %s6 = inlined_call_operand.vmem [shape: f32[16,16], index: 6, kind: input, shape index: {}]
  %s7 = inlined_call_operand.vmem [shape: f32[2,16,64], index: 7, kind: output, shape index: {}]
  %s8 = sld [smem:[#allocation0]]
  $region73: #{spatial_temporal_attention.1} parent=0
    _
  %s10 = ssub.s32 1, %s8
  %s11 = scalar_select 0, %s10, %s8
  $region1: #{spatial_temporal_attention.1} parent=0
    #allocation2 [shape = 'u8[512]{0}', space=smem, size = 0x200, scoped, tag = 'input window, operand 0, single buffered']
    #allocation3 [shape = 's32[2]{0}', space=sflag, size = 0x8, scoped, tag = 'scoped memory for spatial_temporal_attention.1']
    #allocation4 [shape = 'u8[512]{0}', space=smem, size = 0x200, scoped, tag = 'input window, operand 1, single buffered']
    #allocation5 [shape = 's32[1]{0}', space=sflag, size = 0x4, scoped, tag = 'scoped memory for spatial_temporal_attention.1']
    #allocation6 [shape = 'u8[512]{0}', space=smem, size = 0x200, scoped, tag = 'input window, operand 2, single buffered']
    %12 = vsyncpa [#allocation3], 0
    %13 = vsyncpa [#allocation5], 0
    loop: start=0, step=1, limit=4
    $region2: #{spatial_temporal_attention.1} parent=1 // loop_pre_header
      _
    $region3: #{spatial_temporal_attention.1} parent=1 // loop_header
      %s15 = sphi 0, %s19
      %p16 = scmp.ge.s32.totalorder %s15, 4
      %s23 = sphi 0, %s23
      %s25 = sphi 0, %s23
      %s26 = sphi 0, %s25
      %s40 = sphi 0, %s26
      %s44 = sphi 0, %s44
      %s46 = sphi 0, %s44
      %s47 = sphi 0, %s46
      %s61 = sphi 0, %s47
      %s65 = sphi 0, %s65
      %s67 = sphi 0, %s65
      %s68 = sphi 0, %s67
      %s82 = sphi 0, %s68
      %s86 = sphi 0, %s86
      %s88 = sphi 0, %s86
      %s89 = sphi 0, %s88
      %s103 = sphi 0, %s89
      %s109 = sphi 0, %s111
      %s112 = sphi 0, %s109
      %s113 = sphi 0, %s112
      %s129 = sphi 0, %s113
      %s133 = sphi 0, %s133
      %s135 = sphi 0, %s133
      %s136 = sphi 0, %s135
      %s150 = sphi 0, %s136
      %s154 = sphi 0, %s154
      %s156 = sphi 0, %s154
      %s157 = sphi 0, %s156
      %s171 = sphi 0, %s157
      %s177 = sphi 0, %s179
      %s180 = sphi 0, %s177
      %s181 = sphi 0, %s180
      %s197 = sphi 0, %s181
    $region4: #{spatial_temporal_attention.1} parent=1 // loop_header_branch
      %18 = sbr.rel (%p16) target = $region8
    $region5: #{spatial_temporal_attention.1} parent=1 // loop_body
      %s20 = ssub.s32 %s15, 1
      %s21 = ssub.s32 %s15, 2
      %s22 = sadd.s32 %s15, 1
      %s24 = sadd.s32 %s23, 1
      %p27 = scmp.eq.s32.totalorder %s15, 1
      %p28 = scmp.ne.s32.totalorder %s23, %s25
      %p29 = scmp.eq.s32.totalorder %s15, 0
      %p30 = por %p28, %p29
      %p31 = scmp.ne.s32.totalorder %s23, %s25
      %p32 = scmp.eq.s32.totalorder %s20, 1
      %p33 = por %p31, %p32
      %p34 = scmp.ne.s32.totalorder %s25, %s26
      %p35 = scmp.eq.s32.totalorder %s20, 0
      %p36 = por %p34, %p35
      %p37 = scmp.ne.s32.totalorder %s25, %s26
      %p38 = scmp.eq.s32.totalorder %s21, 1
      %p39 = por %p37, %p38
      %p41 = scmp.ne.s32.totalorder %s26, %s40
      %p42 = scmp.eq.s32.totalorder %s21, 0
      %p43 = por %p41, %p42
      %s45 = sadd.s32 %s44, 1
      %p48 = scmp.eq.s32.totalorder %s15, 1
      %p49 = scmp.ne.s32.totalorder %s44, %s46
      %p50 = scmp.eq.s32.totalorder %s15, 0
      %p51 = por %p49, %p50
      %p52 = scmp.ne.s32.totalorder %s44, %s46
      %p53 = scmp.eq.s32.totalorder %s20, 1
      %p54 = por %p52, %p53
      %p55 = scmp.ne.s32.totalorder %s46, %s47
      %p56 = scmp.eq.s32.totalorder %s20, 0
      %p57 = por %p55, %p56
      %p58 = scmp.ne.s32.totalorder %s46, %s47
      %p59 = scmp.eq.s32.totalorder %s21, 1
      %p60 = por %p58, %p59
      %p62 = scmp.ne.s32.totalorder %s47, %s61
      %p63 = scmp.eq.s32.totalorder %s21, 0
      %p64 = por %p62, %p63
      %s66 = sadd.s32 %s65, 1
      %p69 = scmp.eq.s32.totalorder %s15, 1
      %p70 = scmp.ne.s32.totalorder %s65, %s67
      %p71 = scmp.eq.s32.totalorder %s15, 0
      %p72 = por %p70, %p71
      %p73 = scmp.ne.s32.totalorder %s65, %s67
      %p74 = scmp.eq.s32.totalorder %s20, 1
      %p75 = por %p73, %p74
      %p76 = scmp.ne.s32.totalorder %s67, %s68
      %p77 = scmp.eq.s32.totalorder %s20, 0
      %p78 = por %p76, %p77
      %p79 = scmp.ne.s32.totalorder %s67, %s68
      %p80 = scmp.eq.s32.totalorder %s21, 1
      %p81 = por %p79, %p80
      %p83 = scmp.ne.s32.totalorder %s68, %s82
      %p84 = scmp.eq.s32.totalorder %s21, 0
      %p85 = por %p83, %p84
      %s87 = sadd.s32 %s86, 1
      %p90 = scmp.eq.s32.totalorder %s15, 1
      %p91 = scmp.ne.s32.totalorder %s86, %s88
      %p92 = scmp.eq.s32.totalorder %s15, 0
      %p93 = por %p91, %p92
      %p94 = scmp.ne.s32.totalorder %s86, %s88
      %p95 = scmp.eq.s32.totalorder %s20, 1
      %p96 = por %p94, %p95
      %p97 = scmp.ne.s32.totalorder %s88, %s89
      %p98 = scmp.eq.s32.totalorder %s20, 0
      %p99 = por %p97, %p98
      %p100 = scmp.ne.s32.totalorder %s88, %s89
      %p101 = scmp.eq.s32.totalorder %s21, 1
      %p102 = por %p100, %p101
      %p104 = scmp.ne.s32.totalorder %s89, %s103
      %p105 = scmp.eq.s32.totalorder %s21, 0
      %p106 = por %p104, %p105
      %s107 = ssub.s32 %s15, %s22
      %p108 = scmp.eq.s32.totalorder %s107, 0
      %s110 = sadd.s32 %s109, 1
      %s111 = scalar_select %p108, %s109, %s110
      %p114 = pneg %p108
      %p115 = scmp.eq.s32.totalorder %s15, 1
      %p116 = por %p114, %p115
      %p117 = scmp.ne.s32.totalorder %s109, %s112
      %p118 = scmp.eq.s32.totalorder %s15, 0
      %p119 = por %p117, %p118
      %p120 = scmp.ne.s32.totalorder %s109, %s112
      %p121 = scmp.eq.s32.totalorder %s20, 1
      %p122 = por %p120, %p121
      %p123 = scmp.ne.s32.totalorder %s112, %s113
      %p124 = scmp.eq.s32.totalorder %s20, 0
      %p125 = por %p123, %p124
      %p126 = scmp.ne.s32.totalorder %s112, %s113
      %p127 = scmp.eq.s32.totalorder %s21, 1
      %p128 = por %p126, %p127
      %p130 = scmp.ne.s32.totalorder %s113, %s129
      %p131 = scmp.eq.s32.totalorder %s21, 0
      %p132 = por %p130, %p131
      %s134 = sadd.s32 %s133, 1
      %p137 = scmp.eq.s32.totalorder %s15, 1
      %p138 = scmp.ne.s32.totalorder %s133, %s135
      %p139 = scmp.eq.s32.totalorder %s15, 0
      %p140 = por %p138, %p139
      %p141 = scmp.ne.s32.totalorder %s133, %s135
      %p142 = scmp.eq.s32.totalorder %s20, 1
      %p143 = por %p141, %p142
      %p144 = scmp.ne.s32.totalorder %s135, %s136
      %p145 = scmp.eq.s32.totalorder %s20, 0
      %p146 = por %p144, %p145
      %p147 = scmp.ne.s32.totalorder %s135, %s136
      %p148 = scmp.eq.s32.totalorder %s21, 1
      %p149 = por %p147, %p148
      %p151 = scmp.ne.s32.totalorder %s136, %s150
      %p152 = scmp.eq.s32.totalorder %s21, 0
      %p153 = por %p151, %p152
      %s155 = sadd.s32 %s154, 1
      %p158 = scmp.eq.s32.totalorder %s15, 1
      %p159 = scmp.ne.s32.totalorder %s154, %s156
      %p160 = scmp.eq.s32.totalorder %s15, 0
      %p161 = por %p159, %p160
      %p162 = scmp.ne.s32.totalorder %s154, %s156
      %p163 = scmp.eq.s32.totalorder %s20, 1
      %p164 = por %p162, %p163
      %p165 = scmp.ne.s32.totalorder %s156, %s157
      %p166 = scmp.eq.s32.totalorder %s20, 0
      %p167 = por %p165, %p166
      %p168 = scmp.ne.s32.totalorder %s156, %s157
      %p169 = scmp.eq.s32.totalorder %s21, 1
      %p170 = por %p168, %p169
      %p172 = scmp.ne.s32.totalorder %s157, %s171
      %p173 = scmp.eq.s32.totalorder %s21, 0
      %p174 = por %p172, %p173
      %s175 = ssub.s32 %s15, %s22
      %p176 = scmp.eq.s32.totalorder %s175, 0
      %s178 = sadd.s32 %s177, 1
      %s179 = scalar_select %p176, %s177, %s178
      %p182 = pneg %p176
      %p183 = scmp.eq.s32.totalorder %s15, 1
      %p184 = por %p182, %p183
      %p185 = scmp.ne.s32.totalorder %s177, %s180
      %p186 = scmp.eq.s32.totalorder %s15, 0
      %p187 = por %p185, %p186
      %p188 = scmp.ne.s32.totalorder %s177, %s180
      %p189 = scmp.eq.s32.totalorder %s20, 1
      %p190 = por %p188, %p189
      %p191 = scmp.ne.s32.totalorder %s180, %s181
      %p192 = scmp.eq.s32.totalorder %s20, 0
      %p193 = por %p191, %p192
      %p194 = scmp.ne.s32.totalorder %s180, %s181
      %p195 = scmp.eq.s32.totalorder %s21, 1
      %p196 = por %p194, %p195
      %p198 = scmp.ne.s32.totalorder %s181, %s197
      %p199 = scmp.eq.s32.totalorder %s21, 0
      %p200 = por %p198, %p199
      %p201 = scmp.le.s32.totalorder 1, %s15
      %p202 = scmp.lt.s32.totalorder %s15, 3
      %p203 = pnand %p201, %p202
      %p204 = pneg %p203
      // Predicated region
      $region9: #{spatial_temporal_attention.1} parent=5 // pred_check
        _
      $region10: #{spatial_temporal_attention.1} parent=5 // pred_check_branch
        %206 = sbr.rel (%p203) target = $region12
      $region11: #{spatial_temporal_attention.1} parent=5 // pred_region
        %s207 = ssub.s32 %s15, 1
        // Predicated region
        $region13: #{spatial_temporal_attention.1} parent=11 // pred_check
          %p208 = pneg %p36
        $region14: #{spatial_temporal_attention.1} parent=11 // pred_check_branch
          %210 = sbr.rel (%p208) target = $region16
        $region15: #{spatial_temporal_attention.1} parent=11 // pred_region
          %s212 = ssub.s32 16, 16
          %213 = vsyncadd [#allocation3], %s212
          %s215 = sshll.u32 %s0, 4
          %s216 = int_to_ptr.vmem [resolvable:$true] %s215
          %218 = dma.vmem_to_smem %s216, 16, [#allocation2], [#allocation3]
        $region16: #{spatial_temporal_attention.1} parent=11 // pred_fallthru
          _
        // Predicated region
        $region17: #{spatial_temporal_attention.1} parent=11 // pred_check
          %p219 = pneg %p57
        $region18: #{spatial_temporal_attention.1} parent=11 // pred_check_branch
          %221 = sbr.rel (%p219) target = $region20
        $region19: #{spatial_temporal_attention.1} parent=11 // pred_region
          %s223 = ssub.s32 16, 16
          %224 = vsyncadd [#allocation5], %s223
          %s226 = sshll.u32 %s1, 4
          %s227 = int_to_ptr.vmem [resolvable:$true] %s226
          %229 = dma.vmem_to_smem %s227, 16, [#allocation4], [#allocation5]
        $region20: #{spatial_temporal_attention.1} parent=11 // pred_fallthru
          _
        // Predicated region
        $region21: #{spatial_temporal_attention.1} parent=11 // pred_check
          %p230 = pneg %p78
        $region22: #{spatial_temporal_attention.1} parent=11 // pred_check_branch
          %232 = sbr.rel (%p230) target = $region24
        $region23: #{spatial_temporal_attention.1} parent=11 // pred_region
          %s234 = ssub.s32 16, 16
          %235 = vsyncadd [#allocation5], %s234
          %s237 = sshll.u32 %s2, 4
          %s238 = int_to_ptr.vmem [resolvable:$true] %s237
          %240 = dma.vmem_to_smem %s238, 16, [#allocation6], [#allocation5]
        $region24: #{spatial_temporal_attention.1} parent=11 // pred_fallthru
          _
        // Predicated region
        $region25: #{spatial_temporal_attention.1} parent=11 // pred_check
          %p241 = pneg %p99
        $region26: #{spatial_temporal_attention.1} parent=11 // pred_check_branch
          %243 = sbr.rel (%p241) target = $region28
        $region27: #{spatial_temporal_attention.1} parent=11 // pred_region
          _
        $region28: #{spatial_temporal_attention.1} parent=11 // pred_fallthru
          _
        // Predicated region
        $region29: #{spatial_temporal_attention.1} parent=11 // pred_check
          %p244 = pneg %p146
        $region30: #{spatial_temporal_attention.1} parent=11 // pred_check_branch
          %246 = sbr.rel (%p244) target = $region32
        $region31: #{spatial_temporal_attention.1} parent=11 // pred_region
          _
        $region32: #{spatial_temporal_attention.1} parent=11 // pred_fallthru
          _
        // Predicated region
        $region33: #{spatial_temporal_attention.1} parent=11 // pred_check
          %p247 = pneg %p167
        $region34: #{spatial_temporal_attention.1} parent=11 // pred_check_branch
          %249 = sbr.rel (%p247) target = $region36
        $region35: #{spatial_temporal_attention.1} parent=11 // pred_region
          _
        $region36: #{spatial_temporal_attention.1} parent=11 // pred_fallthru
          _
      $region12: #{spatial_temporal_attention.1} parent=5 // pred_fallthru
        _
      %p250 = scmp.lt.s32.totalorder %s15, 2
      // Predicated region
      $region37: #{spatial_temporal_attention.1} parent=5 // pred_check
        %p251 = pneg %p250
      $region38: #{spatial_temporal_attention.1} parent=5 // pred_check_branch
        %253 = sbr.rel (%p251) target = $region40
      $region39: #{spatial_temporal_attention.1} parent=5 // pred_region
        // Predicated region
        $region41: #{spatial_temporal_attention.1} parent=39 // pred_check
          %p254 = pneg %p119
        $region42: #{spatial_temporal_attention.1} parent=39 // pred_check_branch
          %256 = sbr.rel (%p254) target = $region44
        $region43: #{spatial_temporal_attention.1} parent=39 // pred_region
          %p257 = scmp.lt.s32.totalorder %s15, 1
          %s258 = scalar_select %p257, %s15, 1
          %s259 = smul.addr %s258, 8
          %s260 = smul.addr %s259, 8
          %s261 = scalar_lea.vmem %s4, %s260
        $region44: #{spatial_temporal_attention.1} parent=39 // pred_fallthru
          _
      $region40: #{spatial_temporal_attention.1} parent=5 // pred_fallthru
        _
      %p262 = scmp.le.s32.totalorder 1, %s15
      %p263 = scmp.lt.s32.totalorder %s15, 3
      %p264 = pnand %p262, %p263
      %p265 = pneg %p264
      // Predicated region
      $region45: #{spatial_temporal_attention.1} parent=5 // pred_check
        _
      $region46: #{spatial_temporal_attention.1} parent=5 // pred_check_branch
        %267 = sbr.rel (%p264) target = $region48
      $region47: #{spatial_temporal_attention.1} parent=5 // pred_region
        %s268 = ssub.s32 %s15, 1
        // Predicated region
        $region49: #{spatial_temporal_attention.1} parent=47 // pred_check
          %p269 = pneg %p36
        $region50: #{spatial_temporal_attention.1} parent=47 // pred_check_branch
          %271 = sbr.rel (%p269) target = $region52
        $region51: #{spatial_temporal_attention.1} parent=47 // pred_region
          %272 = dma.done [#allocation3], 16
        $region52: #{spatial_temporal_attention.1} parent=47 // pred_fallthru
          _
        // Predicated region
        $region53: #{spatial_temporal_attention.1} parent=47 // pred_check
          %p273 = pneg %p57
        $region54: #{spatial_temporal_attention.1} parent=47 // pred_check_branch
          %275 = sbr.rel (%p273) target = $region56
        $region55: #{spatial_temporal_attention.1} parent=47 // pred_region
          %276 = dma.done [#allocation5], 16
        $region56: #{spatial_temporal_attention.1} parent=47 // pred_fallthru
          _
        // Predicated region
        $region57: #{spatial_temporal_attention.1} parent=47 // pred_check
          %p277 = pneg %p78
        $region58: #{spatial_temporal_attention.1} parent=47 // pred_check_branch
          %279 = sbr.rel (%p277) target = $region60
        $region59: #{spatial_temporal_attention.1} parent=47 // pred_region
          %280 = dma.done [#allocation5], 16
        $region60: #{spatial_temporal_attention.1} parent=47 // pred_fallthru
          _
        %281 = sfence
        %p282 = pneg %p36
        %p283 = pneg %p33
        %p284 = pneg %p57
        %p285 = pneg %p54
        %p286 = pneg %p78
        %p287 = pneg %p75
        %p288 = pneg %p99
        %p289 = pneg %p96
        %p290 = scmp.lt.s32.totalorder %s20, 1
        %s291 = scalar_select %p290, %s20, 1
        %s292 = smul.addr %s291, 8
        %s293 = smul.addr %s292, 8
        %s294 = scalar_lea.vmem %s4, %s293
        %p295 = pneg %p125
        %p296 = pneg %p122
        %p297 = pneg %p146
        %p298 = pneg %p143
        %p299 = pneg %p167
        %p300 = pneg %p164
        %p301 = pneg %p193
        %p302 = pneg %p190
        %p303 = scmp.lt.s32.totalorder %s20, 1
        %s304 = scalar_select %p303, %s20, 1
        %s305 = smul.addr %s304, 2
        %s306 = smul.addr %s305, 8
        %s307 = scalar_lea.vmem %s7, %s306
        %p308 = scmp.lt.s32.totalorder %s20, 1
        %s309 = scalar_select %p308, %s20, 1
        %s310 = smul.addr %s309, 8
        %s311 = smul.addr %s310, 8
        %s312 = scalar_lea.vmem %s4, %s311
        %p313 = scmp.lt.s32.totalorder %s20, 1
        %s314 = scalar_select %p313, %s20, 1
        %s315 = smul.addr %s314, 2
        %s316 = smul.addr %s315, 8
        %s317 = scalar_lea.vmem %s7, %s316
        %v318 = vld [vmem:[%s312] sm:$0xff]
        %v319 = vld [vmem:[%s312 + $0x8] sm:$0xff]
        %v320 = vld [vmem:[%s312 + $0x10] sm:$0xff]
        %v321 = vld [vmem:[%s312 + $0x18] sm:$0xff]
        %v322 = vld [vmem:[%s312 + $0x20] sm:$0xff]
        %v323 = vld [vmem:[%s312 + $0x28] sm:$0xff]
        %v324 = vld [vmem:[%s312 + $0x30] sm:$0xff]
        %v325 = vld [vmem:[%s312 + $0x38] sm:$0xff]
        %v326 = vld [vmem:[%s3] sm:$0x3f]
        %v327 = vlaneseq
        %v328 = vshrl.u32 %v327, 7
        %v329 = vsub.s32 2, %v328
        %v330 = vrot.slane %v326, %v329
        %v331 = vmul.f32 %v318, %v330
        %v332 = vmul.f32 %v319, %v330
        %v333 = vmul.f32 %v320, %v330
        %v334 = vmul.f32 %v321, %v330
        %v335 = vmul.f32 %v322, %v330
        %v336 = vmul.f32 %v323, %v330
        %v337 = vmul.f32 %v324, %v330
        %v338 = vmul.f32 %v325, %v330
        %347 = vrot.lane.b32.xlu0 %v331, 9
        %v348 = vpop.permute.xlu0 %347
        %349 = vrot.lane.b32.xlu0 %v332, 9
        %v350 = vpop.permute.xlu0 %349
        %351 = vrot.lane.b32.xlu0 %v333, 9
        %v352 = vpop.permute.xlu0 %351
        %353 = vrot.lane.b32.xlu0 %v334, 9
        %v354 = vpop.permute.xlu0 %353
        %355 = vrot.lane.b32.xlu0 %v335, 9
        %v356 = vpop.permute.xlu0 %355
        %357 = vrot.lane.b32.xlu0 %v336, 9
        %v358 = vpop.permute.xlu0 %357
        %359 = vrot.lane.b32.xlu0 %v337, 9
        %v360 = vpop.permute.xlu0 %359
        %361 = vrot.lane.b32.xlu0 %v338, 9
        %v362 = vpop.permute.xlu0 %361
        %vm371 = vcmask 72704
        %v372 = vsel %vm371, 0.0, %v348
        %v373 = vsel %vm371, 0.0, %v350
        %v374 = vsel %vm371, 0.0, %v352
        %v375 = vsel %vm371, 0.0, %v354
        %v376 = vsel %vm371, 0.0, %v356
        %v377 = vsel %vm371, 0.0, %v358
        %v378 = vsel %vm371, 0.0, %v360
        %v379 = vsel %vm371, 0.0, %v362
        %vm380 = vcmask 596992
        %v381 = vsel %vm380, %v372, 0.0
        %v382 = vsel %vm380, %v373, 0.0
        %v383 = vsel %vm380, %v374, 0.0
        %v384 = vsel %vm380, %v375, 0.0
        %v385 = vsel %vm380, %v376, 0.0
        %v386 = vsel %vm380, %v377, 0.0
        %v387 = vsel %vm380, %v378, 0.0
        %v388 = vsel %vm380, %v379, 0.0
        %397 = vrot.lane.b32.xlu0 %v318, 9
        %v398 = vpop.permute.xlu0 %397
        %399 = vrot.lane.b32.xlu0 %v319, 9
        %v400 = vpop.permute.xlu0 %399
        %401 = vrot.lane.b32.xlu0 %v320, 9
        %v402 = vpop.permute.xlu0 %401
        %403 = vrot.lane.b32.xlu0 %v321, 9
        %v404 = vpop.permute.xlu0 %403
        %405 = vrot.lane.b32.xlu0 %v322, 9
        %v406 = vpop.permute.xlu0 %405
        %407 = vrot.lane.b32.xlu0 %v323, 9
        %v408 = vpop.permute.xlu0 %407
        %409 = vrot.lane.b32.xlu0 %v324, 9
        %v410 = vpop.permute.xlu0 %409
        %411 = vrot.lane.b32.xlu0 %v325, 9
        %v412 = vpop.permute.xlu0 %411
        %v421 = vsel %vm371, 0.0, %v398
        %v422 = vsel %vm371, 0.0, %v400
        %v423 = vsel %vm371, 0.0, %v402
        %v424 = vsel %vm371, 0.0, %v404
        %v425 = vsel %vm371, 0.0, %v406
        %v426 = vsel %vm371, 0.0, %v408
        %v427 = vsel %vm371, 0.0, %v410
        %v428 = vsel %vm371, 0.0, %v412
        %v429 = vsel %vm380, %v421, 0.0
        %v430 = vsel %vm380, %v422, 0.0
        %v431 = vsel %vm380, %v423, 0.0
        %v432 = vsel %vm380, %v424, 0.0
        %v433 = vsel %vm380, %v425, 0.0
        %v434 = vsel %vm380, %v426, 0.0
        %v435 = vsel %vm380, %v427, 0.0
        %v436 = vsel %vm380, %v428, 0.0
        %v437 = vlaneseq
        %v438 = vshrl.u32 %v437, 7
        %v439 = vsub.s32 3, %v438
        %v440 = vrot.slane %v326, %v439
        %v441 = vmul.f32 %v318, %v440
        %v442 = vmul.f32 %v319, %v440
        %v443 = vmul.f32 %v320, %v440
        %v444 = vmul.f32 %v321, %v440
        %v445 = vmul.f32 %v322, %v440
        %v446 = vmul.f32 %v323, %v440
        %v447 = vmul.f32 %v324, %v440
        %v448 = vmul.f32 %v325, %v440
        %457 = vrot.lane.b32.xlu0 %v441, 9
        %v458 = vpop.permute.xlu0 %457
        %459 = vrot.lane.b32.xlu0 %v442, 9
        %v460 = vpop.permute.xlu0 %459
        %461 = vrot.lane.b32.xlu0 %v443, 9
        %v462 = vpop.permute.xlu0 %461
        %463 = vrot.lane.b32.xlu0 %v444, 9
        %v464 = vpop.permute.xlu0 %463
        %465 = vrot.lane.b32.xlu0 %v445, 9
        %v466 = vpop.permute.xlu0 %465
        %467 = vrot.lane.b32.xlu0 %v446, 9
        %v468 = vpop.permute.xlu0 %467
        %469 = vrot.lane.b32.xlu0 %v447, 9
        %v470 = vpop.permute.xlu0 %469
        %471 = vrot.lane.b32.xlu0 %v448, 9
        %v472 = vpop.permute.xlu0 %471
        %v481 = vsel %vm371, 0.0, %v458
        %v482 = vsel %vm371, 0.0, %v460
        %v483 = vsel %vm371, 0.0, %v462
        %v484 = vsel %vm371, 0.0, %v464
        %v485 = vsel %vm371, 0.0, %v466
        %v486 = vsel %vm371, 0.0, %v468
        %v487 = vsel %vm371, 0.0, %v470
        %v488 = vsel %vm371, 0.0, %v472
        %v489 = vsel %vm380, %v481, 0.0
        %v490 = vsel %vm380, %v482, 0.0
        %v491 = vsel %vm380, %v483, 0.0
        %v492 = vsel %vm380, %v484, 0.0
        %v493 = vsel %vm380, %v485, 0.0
        %v494 = vsel %vm380, %v486, 0.0
        %v495 = vsel %vm380, %v487, 0.0
        %v496 = vsel %vm380, %v488, 0.0
        %s497 = sld [smem:[#allocation2]]
        %v498 = vstv %s497
        %v499 = vmul.f32 %v381, %v498
        %v500 = vmul.f32 %v382, %v498
        %v501 = vadd.f32 %v499, 0.0
        %v502 = vadd.f32 %v500, 0.0
        %s503 = sld [smem:[#allocation2 + $0x3]]
        %v504 = vstv %s503
        %v505 = vmul.f32 %v381, %v504
        %v506 = vmul.f32 %v382, %v504
        %509 = vrot.lane.b32.xlu0 %v505, 120
        %v510 = vpop.permute.xlu0 %509
        %511 = vrot.lane.b32.xlu0 %v506, 120
        %v512 = vpop.permute.xlu0 %511
        %v515 = vadd.f32 %v501, %v510
        %v516 = vadd.f32 %v502, %v512
        %s517 = sld [smem:[#allocation2 + $0x6]]
        %v518 = vstv %s517
        %v519 = vmul.f32 %v381, %v518
        %v520 = vmul.f32 %v382, %v518
        %523 = vrot.lane.b32.xlu0 %v519, 112
        %v524 = vpop.permute.xlu0 %523
        %525 = vrot.lane.b32.xlu0 %v520, 112
        %v526 = vpop.permute.xlu0 %525
        %v529 = vadd.f32 %v515, %v524
        %v530 = vadd.f32 %v516, %v526
        %s531 = sld [smem:[#allocation2 + $0x1]]
        %v532 = vstv %s531
        %v533 = vmul.f32 %v429, %v532
        %v534 = vmul.f32 %v430, %v532
        %537 = vrot.lane.b32.xlu0 %v533, 127
        %v538 = vpop.permute.xlu0 %537
        %539 = vrot.lane.b32.xlu0 %v534, 127
        %v540 = vpop.permute.xlu0 %539
        %v543 = vadd.f32 %v529, %v538
        %v544 = vadd.f32 %v530, %v540
        %s545 = sld [smem:[#allocation2 + $0x4]]
        %v546 = vstv %s545
        %v547 = vmul.f32 %v429, %v546
        %v548 = vmul.f32 %v430, %v546
        %551 = vrot.lane.b32.xlu0 %v547, 119
        %v552 = vpop.permute.xlu0 %551
        %553 = vrot.lane.b32.xlu0 %v548, 119
        %v554 = vpop.permute.xlu0 %553
        %v557 = vadd.f32 %v543, %v552
        %v558 = vadd.f32 %v544, %v554
        %s559 = sld [smem:[#allocation2 + $0x7]]
        %v560 = vstv %s559
        %v561 = vmul.f32 %v429, %v560
        %v562 = vmul.f32 %v430, %v560
        %565 = vrot.lane.b32.xlu0 %v561, 111
        %v566 = vpop.permute.xlu0 %565
        %567 = vrot.lane.b32.xlu0 %v562, 111
        %v568 = vpop.permute.xlu0 %567
        %v571 = vadd.f32 %v557, %v566
        %v572 = vadd.f32 %v558, %v568
        %s573 = sld [smem:[#allocation2 + $0x2]]
        %v574 = vstv %s573
        %v575 = vmul.f32 %v489, %v574
        %v576 = vmul.f32 %v490, %v574
        %579 = vrot.lane.b32.xlu0 %v575, 126
        %v580 = vpop.permute.xlu0 %579
        %581 = vrot.lane.b32.xlu0 %v576, 126
        %v582 = vpop.permute.xlu0 %581
        %v585 = vadd.f32 %v571, %v580
        %v586 = vadd.f32 %v572, %v582
        %s587 = sld [smem:[#allocation2 + $0x5]]
        %v588 = vstv %s587
        %v589 = vmul.f32 %v489, %v588
        %v590 = vmul.f32 %v490, %v588
        %593 = vrot.lane.b32.xlu0 %v589, 118
        %v594 = vpop.permute.xlu0 %593
        %595 = vrot.lane.b32.xlu0 %v590, 118
        %v596 = vpop.permute.xlu0 %595
        %v599 = vadd.f32 %v585, %v594
        %v600 = vadd.f32 %v586, %v596
        %s601 = sld [smem:[#allocation2 + $0x8]]
        %v602 = vstv %s601
        %v603 = vmul.f32 %v489, %v602
        %v604 = vmul.f32 %v490, %v602
        %607 = vrot.lane.b32.xlu0 %v603, 110
        %v608 = vpop.permute.xlu0 %607
        %609 = vrot.lane.b32.xlu0 %v604, 110
        %v610 = vpop.permute.xlu0 %609
        %v613 = vadd.f32 %v599, %v608
        %v614 = vadd.f32 %v600, %v610
        %s615 = sld [smem:[#allocation2 + $0x9]]
        %v616 = vstv %s615
        %v617 = vmul.f32 %v383, %v616
        %v618 = vmul.f32 %v384, %v616
        %v619 = vadd.f32 %v613, %v617
        %v620 = vadd.f32 %v614, %v618
        %s621 = sld [smem:[#allocation2 + $0xc]]
        %v622 = vstv %s621
        %v623 = vmul.f32 %v383, %v622
        %v624 = vmul.f32 %v384, %v622
        %627 = vrot.lane.b32.xlu0 %v623, 120
        %v628 = vpop.permute.xlu0 %627
        %629 = vrot.lane.b32.xlu0 %v624, 120
        %v630 = vpop.permute.xlu0 %629
        %v633 = vadd.f32 %v619, %v628
        %v634 = vadd.f32 %v620, %v630
        %s635 = sld [smem:[#allocation2 + $0xf]]
        %v636 = vstv %s635
        %v637 = vmul.f32 %v383, %v636
        %v638 = vmul.f32 %v384, %v636
        %641 = vrot.lane.b32.xlu0 %v637, 112
        %v642 = vpop.permute.xlu0 %641
        %643 = vrot.lane.b32.xlu0 %v638, 112
        %v644 = vpop.permute.xlu0 %643
        %v647 = vadd.f32 %v633, %v642
        %v648 = vadd.f32 %v634, %v644
        %s649 = sld [smem:[#allocation2 + $0xa]]
        %v650 = vstv %s649
        %v651 = vmul.f32 %v431, %v650
        %v652 = vmul.f32 %v432, %v650
        %655 = vrot.lane.b32.xlu0 %v651, 127
        %v656 = vpop.permute.xlu0 %655
        %657 = vrot.lane.b32.xlu0 %v652, 127
        %v658 = vpop.permute.xlu0 %657
        %v661 = vadd.f32 %v647, %v656
        %v662 = vadd.f32 %v648, %v658
        %s663 = sld [smem:[#allocation2 + $0xd]]
        %v664 = vstv %s663
        %v665 = vmul.f32 %v431, %v664
        %v666 = vmul.f32 %v432, %v664
        %669 = vrot.lane.b32.xlu0 %v665, 119
        %v670 = vpop.permute.xlu0 %669
        %671 = vrot.lane.b32.xlu0 %v666, 119
        %v672 = vpop.permute.xlu0 %671
        %v675 = vadd.f32 %v661, %v670
        %v676 = vadd.f32 %v662, %v672
        %s677 = sld [smem:[#allocation2 + $0x10]]
        %v678 = vstv %s677
        %v679 = vmul.f32 %v431, %v678
        %v680 = vmul.f32 %v432, %v678
        %683 = vrot.lane.b32.xlu0 %v679, 111
        %v684 = vpop.permute.xlu0 %683
        %685 = vrot.lane.b32.xlu0 %v680, 111
        %v686 = vpop.permute.xlu0 %685
        %v689 = vadd.f32 %v675, %v684
        %v690 = vadd.f32 %v676, %v686
        %s691 = sld [smem:[#allocation2 + $0xb]]
        %v692 = vstv %s691
        %v693 = vmul.f32 %v491, %v692
        %v694 = vmul.f32 %v492, %v692
        %697 = vrot.lane.b32.xlu0 %v693, 126
        %v698 = vpop.permute.xlu0 %697
        %699 = vrot.lane.b32.xlu0 %v694, 126
        %v700 = vpop.permute.xlu0 %699
        %v703 = vadd.f32 %v689, %v698
        %v704 = vadd.f32 %v690, %v700
        %s705 = sld [smem:[#allocation2 + $0xe]]
        %v706 = vstv %s705
        %v707 = vmul.f32 %v491, %v706
        %v708 = vmul.f32 %v492, %v706
        %711 = vrot.lane.b32.xlu0 %v707, 118
        %v712 = vpop.permute.xlu0 %711
        %713 = vrot.lane.b32.xlu0 %v708, 118
        %v714 = vpop.permute.xlu0 %713
        %v717 = vadd.f32 %v703, %v712
        %v718 = vadd.f32 %v704, %v714
        %s719 = sld [smem:[#allocation2 + $0x11]]
        %v720 = vstv %s719
        %v721 = vmul.f32 %v491, %v720
        %v722 = vmul.f32 %v492, %v720
        %725 = vrot.lane.b32.xlu0 %v721, 110
        %v726 = vpop.permute.xlu0 %725
        %727 = vrot.lane.b32.xlu0 %v722, 110
        %v728 = vpop.permute.xlu0 %727
        %v731 = vadd.f32 %v717, %v726
        %v732 = vadd.f32 %v718, %v728
        %s733 = sld [smem:[#allocation2 + $0x12]]
        %v734 = vstv %s733
        %v735 = vmul.f32 %v385, %v734
        %v736 = vmul.f32 %v386, %v734
        %v737 = vadd.f32 %v731, %v735
        %v738 = vadd.f32 %v732, %v736
        %s739 = sld [smem:[#allocation2 + $0x15]]
        %v740 = vstv %s739
        %v741 = vmul.f32 %v385, %v740
        %v742 = vmul.f32 %v386, %v740
        %745 = vrot.lane.b32.xlu0 %v741, 120
        %v746 = vpop.permute.xlu0 %745
        %747 = vrot.lane.b32.xlu0 %v742, 120
        %v748 = vpop.permute.xlu0 %747
        %v751 = vadd.f32 %v737, %v746
        %v752 = vadd.f32 %v738, %v748
        %s753 = sld [smem:[#allocation2 + $0x18]]
        %v754 = vstv %s753
        %v755 = vmul.f32 %v385, %v754
        %v756 = vmul.f32 %v386, %v754
        %759 = vrot.lane.b32.xlu0 %v755, 112
        %v760 = vpop.permute.xlu0 %759
        %761 = vrot.lane.b32.xlu0 %v756, 112
        %v762 = vpop.permute.xlu0 %761
        %v765 = vadd.f32 %v751, %v760
        %v766 = vadd.f32 %v752, %v762
        %s767 = sld [smem:[#allocation2 + $0x13]]
        %v768 = vstv %s767
        %v769 = vmul.f32 %v433, %v768
        %v770 = vmul.f32 %v434, %v768
        %773 = vrot.lane.b32.xlu0 %v769, 127
        %v774 = vpop.permute.xlu0 %773
        %775 = vrot.lane.b32.xlu0 %v770, 127
        %v776 = vpop.permute.xlu0 %775
        %v779 = vadd.f32 %v765, %v774
        %v780 = vadd.f32 %v766, %v776
        %s781 = sld [smem:[#allocation2 + $0x16]]
        %v782 = vstv %s781
        %v783 = vmul.f32 %v433, %v782
        %v784 = vmul.f32 %v434, %v782
        %787 = vrot.lane.b32.xlu0 %v783, 119
        %v788 = vpop.permute.xlu0 %787
        %789 = vrot.lane.b32.xlu0 %v784, 119
        %v790 = vpop.permute.xlu0 %789
        %v793 = vadd.f32 %v779, %v788
        %v794 = vadd.f32 %v780, %v790
        %s795 = sld [smem:[#allocation2 + $0x19]]
        %v796 = vstv %s795
        %v797 = vmul.f32 %v433, %v796
        %v798 = vmul.f32 %v434, %v796
        %801 = vrot.lane.b32.xlu0 %v797, 111
        %v802 = vpop.permute.xlu0 %801
        %803 = vrot.lane.b32.xlu0 %v798, 111
        %v804 = vpop.permute.xlu0 %803
        %v807 = vadd.f32 %v793, %v802
        %v808 = vadd.f32 %v794, %v804
        %s809 = sld [smem:[#allocation2 + $0x14]]
        %v810 = vstv %s809
        %v811 = vmul.f32 %v493, %v810
        %v812 = vmul.f32 %v494, %v810
        %815 = vrot.lane.b32.xlu0 %v811, 126
        %v816 = vpop.permute.xlu0 %815
        %817 = vrot.lane.b32.xlu0 %v812, 126
        %v818 = vpop.permute.xlu0 %817
        %v821 = vadd.f32 %v807, %v816
        %v822 = vadd.f32 %v808, %v818
        %s823 = sld [smem:[#allocation2 + $0x17]]
        %v824 = vstv %s823
        %v825 = vmul.f32 %v493, %v824
        %v826 = vmul.f32 %v494, %v824
        %829 = vrot.lane.b32.xlu0 %v825, 118
        %v830 = vpop.permute.xlu0 %829
        %831 = vrot.lane.b32.xlu0 %v826, 118
        %v832 = vpop.permute.xlu0 %831
        %v835 = vadd.f32 %v821, %v830
        %v836 = vadd.f32 %v822, %v832
        %s837 = sld [smem:[#allocation2 + $0x1a]]
        %v838 = vstv %s837
        %v839 = vmul.f32 %v493, %v838
        %v840 = vmul.f32 %v494, %v838
        %843 = vrot.lane.b32.xlu0 %v839, 110
        %v844 = vpop.permute.xlu0 %843
        %845 = vrot.lane.b32.xlu0 %v840, 110
        %v846 = vpop.permute.xlu0 %845
        %v849 = vadd.f32 %v835, %v844
        %v850 = vadd.f32 %v836, %v846
        %s851 = sld [smem:[#allocation2 + $0x1b]]
        %v852 = vstv %s851
        %v853 = vmul.f32 %v387, %v852
        %v854 = vmul.f32 %v388, %v852
        %v855 = vadd.f32 %v849, %v853
        %v856 = vadd.f32 %v850, %v854
        %s857 = sld [smem:[#allocation2 + $0x1e]]
        %v858 = vstv %s857
        %v859 = vmul.f32 %v387, %v858
        %v860 = vmul.f32 %v388, %v858
        %863 = vrot.lane.b32.xlu0 %v859, 120
        %v864 = vpop.permute.xlu0 %863
        %865 = vrot.lane.b32.xlu0 %v860, 120
        %v866 = vpop.permute.xlu0 %865
        %v869 = vadd.f32 %v855, %v864
        %v870 = vadd.f32 %v856, %v866
        %s871 = sld [smem:[#allocation2 + $0x21]]
        %v872 = vstv %s871
        %v873 = vmul.f32 %v387, %v872
        %v874 = vmul.f32 %v388, %v872
        %877 = vrot.lane.b32.xlu0 %v873, 112
        %v878 = vpop.permute.xlu0 %877
        %879 = vrot.lane.b32.xlu0 %v874, 112
        %v880 = vpop.permute.xlu0 %879
        %v883 = vadd.f32 %v869, %v878
        %v884 = vadd.f32 %v870, %v880
        %s885 = sld [smem:[#allocation2 + $0x1c]]
        %v886 = vstv %s885
        %v887 = vmul.f32 %v435, %v886
        %v888 = vmul.f32 %v436, %v886
        %891 = vrot.lane.b32.xlu0 %v887, 127
        %v892 = vpop.permute.xlu0 %891
        %893 = vrot.lane.b32.xlu0 %v888, 127
        %v894 = vpop.permute.xlu0 %893
        %v897 = vadd.f32 %v883, %v892
        %v898 = vadd.f32 %v884, %v894
        %s899 = sld [smem:[#allocation2 + $0x1f]]
        %v900 = vstv %s899
        %v901 = vmul.f32 %v435, %v900
        %v902 = vmul.f32 %v436, %v900
        %905 = vrot.lane.b32.xlu0 %v901, 119
        %v906 = vpop.permute.xlu0 %905
        %907 = vrot.lane.b32.xlu0 %v902, 119
        %v908 = vpop.permute.xlu0 %907
        %v911 = vadd.f32 %v897, %v906
        %v912 = vadd.f32 %v898, %v908
        %s913 = sld [smem:[#allocation2 + $0x22]]
        %v914 = vstv %s913
        %v915 = vmul.f32 %v435, %v914
        %v916 = vmul.f32 %v436, %v914
        %919 = vrot.lane.b32.xlu0 %v915, 111
        %v920 = vpop.permute.xlu0 %919
        %921 = vrot.lane.b32.xlu0 %v916, 111
        %v922 = vpop.permute.xlu0 %921
        %v925 = vadd.f32 %v911, %v920
        %v926 = vadd.f32 %v912, %v922
        %s927 = sld [smem:[#allocation2 + $0x1d]]
        %v928 = vstv %s927
        %v929 = vmul.f32 %v495, %v928
        %v930 = vmul.f32 %v496, %v928
        %933 = vrot.lane.b32.xlu0 %v929, 126
        %v934 = vpop.permute.xlu0 %933
        %935 = vrot.lane.b32.xlu0 %v930, 126
        %v936 = vpop.permute.xlu0 %935
        %v939 = vadd.f32 %v925, %v934
        %v940 = vadd.f32 %v926, %v936
        %s941 = sld [smem:[#allocation2 + $0x20]]
        %v942 = vstv %s941
        %v943 = vmul.f32 %v495, %v942
        %v944 = vmul.f32 %v496, %v942
        %947 = vrot.lane.b32.xlu0 %v943, 118
        %v948 = vpop.permute.xlu0 %947
        %949 = vrot.lane.b32.xlu0 %v944, 118
        %v950 = vpop.permute.xlu0 %949
        %v953 = vadd.f32 %v939, %v948
        %v954 = vadd.f32 %v940, %v950
        %s955 = sld [smem:[#allocation2 + $0x23]]
        %v956 = vstv %s955
        %v957 = vmul.f32 %v495, %v956
        %v958 = vmul.f32 %v496, %v956
        %961 = vrot.lane.b32.xlu0 %v957, 110
        %v962 = vpop.permute.xlu0 %961
        %963 = vrot.lane.b32.xlu0 %v958, 110
        %v964 = vpop.permute.xlu0 %963
        %v967 = vadd.f32 %v953, %v962
        %v968 = vadd.f32 %v954, %v964
        %s969 = sld [smem:[#allocation6]]
        %v970 = vstv %s969
        %v971 = vadd.f32 %v967, %v970
        %v972 = vadd.f32 %v968, %v970
        %v973 = vmax.f32 %v971, 0.0
        %v974 = vmax.f32 %v972, 0.0
        %v975 = vlaneseq
        %v976 = vshrl.u32 %v975, 7
        %v977 = vsub.s32 0, %v976
        %v978 = vrot.slane %v326, %v977
        %v979 = vmul.f32 %v973, %v978
        %v980 = vmul.f32 %v974, %v978
        %983 = vrot.lane.b32.xlu0 %v979, 27
        %v984 = vpop.permute.xlu0 %983
        %985 = vrot.lane.b32.xlu0 %v980, 27
        %v986 = vpop.permute.xlu0 %985
        %vm989 = vcmask 220160
        %v990 = vsel %vm989, 0.0, %v984
        %v991 = vsel %vm989, 0.0, %v986
        %vm992 = vcmask 744448
        %v993 = vsel %vm992, %v990, 0.0
        %v994 = vsel %vm992, %v991, 0.0
        %v995 = vlaneseq
        %v996 = vshrl.u32 %v995, 7
        %v997 = vsub.s32 1, %v996
        %v998 = vrot.slane %v326, %v997
        %v999 = vmul.f32 %v973, %v998
        %v1000 = vmul.f32 %v974, %v998
        %1003 = vrot.lane.b32.xlu0 %v999, 27
        %v1004 = vpop.permute.xlu0 %1003
        %1005 = vrot.lane.b32.xlu0 %v1000, 27
        %v1006 = vpop.permute.xlu0 %1005
        %v1009 = vsel %vm989, 0.0, %v1004
        %v1010 = vsel %vm989, 0.0, %v1006
        %v1011 = vsel %vm992, %v1009, 0.0
        %v1012 = vsel %vm992, %v1010, 0.0
        %v1013 = vmul.f32 %v973, %v330
        %v1014 = vmul.f32 %v974, %v330
        %1017 = vrot.lane.b32.xlu0 %v1013, 27
        %v1018 = vpop.permute.xlu0 %1017
        %1019 = vrot.lane.b32.xlu0 %v1014, 27
        %v1020 = vpop.permute.xlu0 %1019
        %v1023 = vsel %vm989, 0.0, %v1018
        %v1024 = vsel %vm989, 0.0, %v1020
        %v1025 = vsel %vm992, %v1023, 0.0
        %v1026 = vsel %vm992, %v1024, 0.0
        %1029 = vrot.lane.b32.xlu0 %v973, 27
        %v1030 = vpop.permute.xlu0 %1029
        %1031 = vrot.lane.b32.xlu0 %v974, 27
        %v1032 = vpop.permute.xlu0 %1031
        %v1035 = vsel %vm989, 0.0, %v1030
        %v1036 = vsel %vm989, 0.0, %v1032
        %v1037 = vsel %vm992, %v1035, 0.0
        %v1038 = vsel %vm992, %v1036, 0.0
        %v1039 = vmul.f32 %v973, %v440
        %v1040 = vmul.f32 %v974, %v440
        %1043 = vrot.lane.b32.xlu0 %v1039, 27
        %v1044 = vpop.permute.xlu0 %1043
        %1045 = vrot.lane.b32.xlu0 %v1040, 27
        %v1046 = vpop.permute.xlu0 %1045
        %v1049 = vsel %vm989, 0.0, %v1044
        %v1050 = vsel %vm989, 0.0, %v1046
        %v1051 = vsel %vm992, %v1049, 0.0
        %v1052 = vsel %vm992, %v1050, 0.0
        %v1053 = vlaneseq
        %v1054 = vshrl.u32 %v1053, 7
        %v1055 = vsub.s32 4, %v1054
        %v1056 = vrot.slane %v326, %v1055
        %v1057 = vmul.f32 %v973, %v1056
        %v1058 = vmul.f32 %v974, %v1056
        %1061 = vrot.lane.b32.xlu0 %v1057, 27
        %v1062 = vpop.permute.xlu0 %1061
        %1063 = vrot.lane.b32.xlu0 %v1058, 27
        %v1064 = vpop.permute.xlu0 %1063
        %v1067 = vsel %vm989, 0.0, %v1062
        %v1068 = vsel %vm989, 0.0, %v1064
        %v1069 = vsel %vm992, %v1067, 0.0
        %v1070 = vsel %vm992, %v1068, 0.0
        %v1071 = vlaneseq
        %v1072 = vshrl.u32 %v1071, 7
        %v1073 = vsub.s32 5, %v1072
        %v1074 = vrot.slane %v326, %v1073
        %v1075 = vmul.f32 %v973, %v1074
        %v1076 = vmul.f32 %v974, %v1074
        %1079 = vrot.lane.b32.xlu0 %v1075, 27
        %v1080 = vpop.permute.xlu0 %1079
        %1081 = vrot.lane.b32.xlu0 %v1076, 27
        %v1082 = vpop.permute.xlu0 %1081
        %v1085 = vsel %vm989, 0.0, %v1080
        %v1086 = vsel %vm989, 0.0, %v1082
        %v1087 = vsel %vm992, %v1085, 0.0
        %v1088 = vsel %vm992, %v1086, 0.0
        %s1089 = sld [smem:[#allocation4]]
        %v1090 = vstv %s1089
        %v1091 = vmul.f32 %v993, %v1090
        %v1092 = vmul.f32 %v994, %v1090
        %v1093 = vadd.f32 %v1091, 0.0
        %v1094 = vadd.f32 %v1092, 0.0
        %s1095 = sld [smem:[#allocation4 + $0x7]]
        %v1096 = vstv %s1095
        %v1097 = vmul.f32 %v993, %v1096
        %v1098 = vmul.f32 %v994, %v1096
        %1101 = vrot.lane.b32.xlu0 %v1097, 120
        %v1102 = vpop.permute.xlu0 %1101
        %1103 = vrot.lane.b32.xlu0 %v1098, 120
        %v1104 = vpop.permute.xlu0 %1103
        %v1107 = vadd.f32 %v1093, %v1102
        %v1108 = vadd.f32 %v1094, %v1104
        %s1109 = sld [smem:[#allocation4 + $0xe]]
        %v1110 = vstv %s1109
        %v1111 = vmul.f32 %v993, %v1110
        %v1112 = vmul.f32 %v994, %v1110
        %1115 = vrot.lane.b32.xlu0 %v1111, 112
        %v1116 = vpop.permute.xlu0 %1115
        %1117 = vrot.lane.b32.xlu0 %v1112, 112
        %v1118 = vpop.permute.xlu0 %1117
        %v1121 = vadd.f32 %v1107, %v1116
        %v1122 = vadd.f32 %v1108, %v1118
        %s1123 = sld [smem:[#allocation4 + $0x15]]
        %v1124 = vstv %s1123
        %v1125 = vmul.f32 %v993, %v1124
        %v1126 = vmul.f32 %v994, %v1124
        %1129 = vrot.lane.b32.xlu0 %v1125, 104
        %v1130 = vpop.permute.xlu0 %1129
        %1131 = vrot.lane.b32.xlu0 %v1126, 104
        %v1132 = vpop.permute.xlu0 %1131
        %v1135 = vadd.f32 %v1121, %v1130
        %v1136 = vadd.f32 %v1122, %v1132
        %s1137 = sld [smem:[#allocation4 + $0x1c]]
        %v1138 = vstv %s1137
        %v1139 = vmul.f32 %v993, %v1138
        %v1140 = vmul.f32 %v994, %v1138
        %1143 = vrot.lane.b32.xlu0 %v1139, 96
        %v1144 = vpop.permute.xlu0 %1143
        %1145 = vrot.lane.b32.xlu0 %v1140, 96
        %v1146 = vpop.permute.xlu0 %1145
        %v1149 = vadd.f32 %v1135, %v1144
        %v1150 = vadd.f32 %v1136, %v1146
        %s1151 = sld [smem:[#allocation4 + $0x23]]
        %v1152 = vstv %s1151
        %v1153 = vmul.f32 %v993, %v1152
        %v1154 = vmul.f32 %v994, %v1152
        %1157 = vrot.lane.b32.xlu0 %v1153, 88
        %v1158 = vpop.permute.xlu0 %1157
        %1159 = vrot.lane.b32.xlu0 %v1154, 88
        %v1160 = vpop.permute.xlu0 %1159
        %v1163 = vadd.f32 %v1149, %v1158
        %v1164 = vadd.f32 %v1150, %v1160
        %s1165 = sld [smem:[#allocation4 + $0x2a]]
        %v1166 = vstv %s1165
        %v1167 = vmul.f32 %v993, %v1166
        %v1168 = vmul.f32 %v994, %v1166
        %1171 = vrot.lane.b32.xlu0 %v1167, 80
        %v1172 = vpop.permute.xlu0 %1171
        %1173 = vrot.lane.b32.xlu0 %v1168, 80
        %v1174 = vpop.permute.xlu0 %1173
        %v1177 = vadd.f32 %v1163, %v1172
        %v1178 = vadd.f32 %v1164, %v1174
        %s1179 = sld [smem:[#allocation4 + $0x1]]
        %v1180 = vstv %s1179
        %v1181 = vmul.f32 %v1011, %v1180
        %v1182 = vmul.f32 %v1012, %v1180
        %1185 = vrot.lane.b32.xlu0 %v1181, 127
        %v1186 = vpop.permute.xlu0 %1185
        %1187 = vrot.lane.b32.xlu0 %v1182, 127
        %v1188 = vpop.permute.xlu0 %1187
        %v1191 = vadd.f32 %v1177, %v1186
        %v1192 = vadd.f32 %v1178, %v1188
        %s1193 = sld [smem:[#allocation4 + $0x8]]
        %v1194 = vstv %s1193
        %v1195 = vmul.f32 %v1011, %v1194
        %v1196 = vmul.f32 %v1012, %v1194
        %1199 = vrot.lane.b32.xlu0 %v1195, 119
        %v1200 = vpop.permute.xlu0 %1199
        %1201 = vrot.lane.b32.xlu0 %v1196, 119
        %v1202 = vpop.permute.xlu0 %1201
        %v1205 = vadd.f32 %v1191, %v1200
        %v1206 = vadd.f32 %v1192, %v1202
        %s1207 = sld [smem:[#allocation4 + $0xf]]
        %v1208 = vstv %s1207
        %v1209 = vmul.f32 %v1011, %v1208
        %v1210 = vmul.f32 %v1012, %v1208
        %1213 = vrot.lane.b32.xlu0 %v1209, 111
        %v1214 = vpop.permute.xlu0 %1213
        %1215 = vrot.lane.b32.xlu0 %v1210, 111
        %v1216 = vpop.permute.xlu0 %1215
        %v1219 = vadd.f32 %v1205, %v1214
        %v1220 = vadd.f32 %v1206, %v1216
        %s1221 = sld [smem:[#allocation4 + $0x16]]
        %v1222 = vstv %s1221
        %v1223 = vmul.f32 %v1011, %v1222
        %v1224 = vmul.f32 %v1012, %v1222
        %1227 = vrot.lane.b32.xlu0 %v1223, 103
        %v1228 = vpop.permute.xlu0 %1227
        %1229 = vrot.lane.b32.xlu0 %v1224, 103
        %v1230 = vpop.permute.xlu0 %1229
        %v1233 = vadd.f32 %v1219, %v1228
        %v1234 = vadd.f32 %v1220, %v1230
        %s1235 = sld [smem:[#allocation4 + $0x1d]]
        %v1236 = vstv %s1235
        %v1237 = vmul.f32 %v1011, %v1236
        %v1238 = vmul.f32 %v1012, %v1236
        %1241 = vrot.lane.b32.xlu0 %v1237, 95
        %v1242 = vpop.permute.xlu0 %1241
        %1243 = vrot.lane.b32.xlu0 %v1238, 95
        %v1244 = vpop.permute.xlu0 %1243
        %v1247 = vadd.f32 %v1233, %v1242
        %v1248 = vadd.f32 %v1234, %v1244
        %s1249 = sld [smem:[#allocation4 + $0x24]]
        %v1250 = vstv %s1249
        %v1251 = vmul.f32 %v1011, %v1250
        %v1252 = vmul.f32 %v1012, %v1250
        %1255 = vrot.lane.b32.xlu0 %v1251, 87
        %v1256 = vpop.permute.xlu0 %1255
        %1257 = vrot.lane.b32.xlu0 %v1252, 87
        %v1258 = vpop.permute.xlu0 %1257
        %v1261 = vadd.f32 %v1247, %v1256
        %v1262 = vadd.f32 %v1248, %v1258
        %s1263 = sld [smem:[#allocation4 + $0x2b]]
        %v1264 = vstv %s1263
        %v1265 = vmul.f32 %v1011, %v1264
        %v1266 = vmul.f32 %v1012, %v1264
        %1269 = vrot.lane.b32.xlu0 %v1265, 79
        %v1270 = vpop.permute.xlu0 %1269
        %1271 = vrot.lane.b32.xlu0 %v1266, 79
        %v1272 = vpop.permute.xlu0 %1271
        %v1275 = vadd.f32 %v1261, %v1270
        %v1276 = vadd.f32 %v1262, %v1272
        %s1277 = sld [smem:[#allocation4 + $0x2]]
        %v1278 = vstv %s1277
        %v1279 = vmul.f32 %v1025, %v1278
        %v1280 = vmul.f32 %v1026, %v1278
        %1283 = vrot.lane.b32.xlu0 %v1279, 126
        %v1284 = vpop.permute.xlu0 %1283
        %1285 = vrot.lane.b32.xlu0 %v1280, 126
        %v1286 = vpop.permute.xlu0 %1285
        %v1289 = vadd.f32 %v1275, %v1284
        %v1290 = vadd.f32 %v1276, %v1286
        %s1291 = sld [smem:[#allocation4 + $0x9]]
        %v1292 = vstv %s1291
        %v1293 = vmul.f32 %v1025, %v1292
        %v1294 = vmul.f32 %v1026, %v1292
        %1297 = vrot.lane.b32.xlu0 %v1293, 118
        %v1298 = vpop.permute.xlu0 %1297
        %1299 = vrot.lane.b32.xlu0 %v1294, 118
        %v1300 = vpop.permute.xlu0 %1299
        %v1303 = vadd.f32 %v1289, %v1298
        %v1304 = vadd.f32 %v1290, %v1300
        %s1305 = sld [smem:[#allocation4 + $0x10]]
        %v1306 = vstv %s1305
        %v1307 = vmul.f32 %v1025, %v1306
        %v1308 = vmul.f32 %v1026, %v1306
        %1311 = vrot.lane.b32.xlu0 %v1307, 110
        %v1312 = vpop.permute.xlu0 %1311
        %1313 = vrot.lane.b32.xlu0 %v1308, 110
        %v1314 = vpop.permute.xlu0 %1313
        %v1317 = vadd.f32 %v1303, %v1312
        %v1318 = vadd.f32 %v1304, %v1314
        %s1319 = sld [smem:[#allocation4 + $0x17]]
        %v1320 = vstv %s1319
        %v1321 = vmul.f32 %v1025, %v1320
        %v1322 = vmul.f32 %v1026, %v1320
        %1325 = vrot.lane.b32.xlu0 %v1321, 102
        %v1326 = vpop.permute.xlu0 %1325
        %1327 = vrot.lane.b32.xlu0 %v1322, 102
        %v1328 = vpop.permute.xlu0 %1327
        %v1331 = vadd.f32 %v1317, %v1326
        %v1332 = vadd.f32 %v1318, %v1328
        %s1333 = sld [smem:[#allocation4 + $0x1e]]
        %v1334 = vstv %s1333
        %v1335 = vmul.f32 %v1025, %v1334
        %v1336 = vmul.f32 %v1026, %v1334
        %1339 = vrot.lane.b32.xlu0 %v1335, 94
        %v1340 = vpop.permute.xlu0 %1339
        %1341 = vrot.lane.b32.xlu0 %v1336, 94
        %v1342 = vpop.permute.xlu0 %1341
        %v1345 = vadd.f32 %v1331, %v1340
        %v1346 = vadd.f32 %v1332, %v1342
        %s1347 = sld [smem:[#allocation4 + $0x25]]
        %v1348 = vstv %s1347
        %v1349 = vmul.f32 %v1025, %v1348
        %v1350 = vmul.f32 %v1026, %v1348
        %1353 = vrot.lane.b32.xlu0 %v1349, 86
        %v1354 = vpop.permute.xlu0 %1353
        %1355 = vrot.lane.b32.xlu0 %v1350, 86
        %v1356 = vpop.permute.xlu0 %1355
        %v1359 = vadd.f32 %v1345, %v1354
        %v1360 = vadd.f32 %v1346, %v1356
        %s1361 = sld [smem:[#allocation4 + $0x2c]]
        %v1362 = vstv %s1361
        %v1363 = vmul.f32 %v1025, %v1362
        %v1364 = vmul.f32 %v1026, %v1362
        %1367 = vrot.lane.b32.xlu0 %v1363, 78
        %v1368 = vpop.permute.xlu0 %1367
        %1369 = vrot.lane.b32.xlu0 %v1364, 78
        %v1370 = vpop.permute.xlu0 %1369
        %v1373 = vadd.f32 %v1359, %v1368
        %v1374 = vadd.f32 %v1360, %v1370
        %s1375 = sld [smem:[#allocation4 + $0x3]]
        %v1376 = vstv %s1375
        %v1377 = vmul.f32 %v1037, %v1376
        %v1378 = vmul.f32 %v1038, %v1376
        %1381 = vrot.lane.b32.xlu0 %v1377, 125
        %v1382 = vpop.permute.xlu0 %1381
        %1383 = vrot.lane.b32.xlu0 %v1378, 125
        %v1384 = vpop.permute.xlu0 %1383
        %v1387 = vadd.f32 %v1373, %v1382
        %v1388 = vadd.f32 %v1374, %v1384
        %s1389 = sld [smem:[#allocation4 + $0xa]]
        %v1390 = vstv %s1389
        %v1391 = vmul.f32 %v1037, %v1390
        %v1392 = vmul.f32 %v1038, %v1390
        %1395 = vrot.lane.b32.xlu0 %v1391, 117
        %v1396 = vpop.permute.xlu0 %1395
        %1397 = vrot.lane.b32.xlu0 %v1392, 117
        %v1398 = vpop.permute.xlu0 %1397
        %v1401 = vadd.f32 %v1387, %v1396
        %v1402 = vadd.f32 %v1388, %v1398
        %s1403 = sld [smem:[#allocation4 + $0x11]]
        %v1404 = vstv %s1403
        %v1405 = vmul.f32 %v1037, %v1404
        %v1406 = vmul.f32 %v1038, %v1404
        %1409 = vrot.lane.b32.xlu0 %v1405, 109
        %v1410 = vpop.permute.xlu0 %1409
        %1411 = vrot.lane.b32.xlu0 %v1406, 109
        %v1412 = vpop.permute.xlu0 %1411
        %v1415 = vadd.f32 %v1401, %v1410
        %v1416 = vadd.f32 %v1402, %v1412
        %s1417 = sld [smem:[#allocation4 + $0x18]]
        %v1418 = vstv %s1417
        %v1419 = vmul.f32 %v1037, %v1418
        %v1420 = vmul.f32 %v1038, %v1418
        %1423 = vrot.lane.b32.xlu0 %v1419, 101
        %v1424 = vpop.permute.xlu0 %1423
        %1425 = vrot.lane.b32.xlu0 %v1420, 101
        %v1426 = vpop.permute.xlu0 %1425
        %v1429 = vadd.f32 %v1415, %v1424
        %v1430 = vadd.f32 %v1416, %v1426
        %s1431 = sld [smem:[#allocation4 + $0x1f]]
        %v1432 = vstv %s1431
        %v1433 = vmul.f32 %v1037, %v1432
        %v1434 = vmul.f32 %v1038, %v1432
        %1437 = vrot.lane.b32.xlu0 %v1433, 93
        %v1438 = vpop.permute.xlu0 %1437
        %1439 = vrot.lane.b32.xlu0 %v1434, 93
        %v1440 = vpop.permute.xlu0 %1439
        %v1443 = vadd.f32 %v1429, %v1438
        %v1444 = vadd.f32 %v1430, %v1440
        %s1445 = sld [smem:[#allocation4 + $0x26]]
        %v1446 = vstv %s1445
        %v1447 = vmul.f32 %v1037, %v1446
        %v1448 = vmul.f32 %v1038, %v1446
        %1451 = vrot.lane.b32.xlu0 %v1447, 85
        %v1452 = vpop.permute.xlu0 %1451
        %1453 = vrot.lane.b32.xlu0 %v1448, 85
        %v1454 = vpop.permute.xlu0 %1453
        %v1457 = vadd.f32 %v1443, %v1452
        %v1458 = vadd.f32 %v1444, %v1454
        %s1459 = sld [smem:[#allocation4 + $0x2d]]
        %v1460 = vstv %s1459
        %v1461 = vmul.f32 %v1037, %v1460
        %v1462 = vmul.f32 %v1038, %v1460
        %1465 = vrot.lane.b32.xlu0 %v1461, 77
        %v1466 = vpop.permute.xlu0 %1465
        %1467 = vrot.lane.b32.xlu0 %v1462, 77
        %v1468 = vpop.permute.xlu0 %1467
        %v1471 = vadd.f32 %v1457, %v1466
        %v1472 = vadd.f32 %v1458, %v1468
        %s1473 = sld [smem:[#allocation4 + $0x4]]
        %v1474 = vstv %s1473
        %v1475 = vmul.f32 %v1051, %v1474
        %v1476 = vmul.f32 %v1052, %v1474
        %1479 = vrot.lane.b32.xlu0 %v1475, 124
        %v1480 = vpop.permute.xlu0 %1479
        %1481 = vrot.lane.b32.xlu0 %v1476, 124
        %v1482 = vpop.permute.xlu0 %1481
        %v1485 = vadd.f32 %v1471, %v1480
        %v1486 = vadd.f32 %v1472, %v1482
        %s1487 = sld [smem:[#allocation4 + $0xb]]
        %v1488 = vstv %s1487
        %v1489 = vmul.f32 %v1051, %v1488
        %v1490 = vmul.f32 %v1052, %v1488
        %1493 = vrot.lane.b32.xlu0 %v1489, 116
        %v1494 = vpop.permute.xlu0 %1493
        %1495 = vrot.lane.b32.xlu0 %v1490, 116
        %v1496 = vpop.permute.xlu0 %1495
        %v1499 = vadd.f32 %v1485, %v1494
        %v1500 = vadd.f32 %v1486, %v1496
        %s1501 = sld [smem:[#allocation4 + $0x12]]
        %v1502 = vstv %s1501
        %v1503 = vmul.f32 %v1051, %v1502
        %v1504 = vmul.f32 %v1052, %v1502
        %1507 = vrot.lane.b32.xlu0 %v1503, 108
        %v1508 = vpop.permute.xlu0 %1507
        %1509 = vrot.lane.b32.xlu0 %v1504, 108
        %v1510 = vpop.permute.xlu0 %1509
        %v1513 = vadd.f32 %v1499, %v1508
        %v1514 = vadd.f32 %v1500, %v1510
        %s1515 = sld [smem:[#allocation4 + $0x19]]
        %v1516 = vstv %s1515
        %v1517 = vmul.f32 %v1051, %v1516
        %v1518 = vmul.f32 %v1052, %v1516
        %1521 = vrot.lane.b32.xlu0 %v1517, 100
        %v1522 = vpop.permute.xlu0 %1521
        %1523 = vrot.lane.b32.xlu0 %v1518, 100
        %v1524 = vpop.permute.xlu0 %1523
        %v1527 = vadd.f32 %v1513, %v1522
        %v1528 = vadd.f32 %v1514, %v1524
        %s1529 = sld [smem:[#allocation4 + $0x20]]
        %v1530 = vstv %s1529
        %v1531 = vmul.f32 %v1051, %v1530
        %v1532 = vmul.f32 %v1052, %v1530
        %1535 = vrot.lane.b32.xlu0 %v1531, 92
        %v1536 = vpop.permute.xlu0 %1535
        %1537 = vrot.lane.b32.xlu0 %v1532, 92
        %v1538 = vpop.permute.xlu0 %1537
        %v1541 = vadd.f32 %v1527, %v1536
        %v1542 = vadd.f32 %v1528, %v1538
        %s1543 = sld [smem:[#allocation4 + $0x27]]
        %v1544 = vstv %s1543
        %v1545 = vmul.f32 %v1051, %v1544
        %v1546 = vmul.f32 %v1052, %v1544
        %1549 = vrot.lane.b32.xlu0 %v1545, 84
        %v1550 = vpop.permute.xlu0 %1549
        %1551 = vrot.lane.b32.xlu0 %v1546, 84
        %v1552 = vpop.permute.xlu0 %1551
        %v1555 = vadd.f32 %v1541, %v1550
        %v1556 = vadd.f32 %v1542, %v1552
        %s1557 = sld [smem:[#allocation4 + $0x2e]]
        %v1558 = vstv %s1557
        %v1559 = vmul.f32 %v1051, %v1558
        %v1560 = vmul.f32 %v1052, %v1558
        %1563 = vrot.lane.b32.xlu0 %v1559, 76
        %v1564 = vpop.permute.xlu0 %1563
        %1565 = vrot.lane.b32.xlu0 %v1560, 76
        %v1566 = vpop.permute.xlu0 %1565
        %v1569 = vadd.f32 %v1555, %v1564
        %v1570 = vadd.f32 %v1556, %v1566
        %s1571 = sld [smem:[#allocation4 + $0x5]]
        %v1572 = vstv %s1571
        %v1573 = vmul.f32 %v1069, %v1572
        %v1574 = vmul.f32 %v1070, %v1572
        %1577 = vrot.lane.b32.xlu0 %v1573, 123
        %v1578 = vpop.permute.xlu0 %1577
        %1579 = vrot.lane.b32.xlu0 %v1574, 123
        %v1580 = vpop.permute.xlu0 %1579
        %v1583 = vadd.f32 %v1569, %v1578
        %v1584 = vadd.f32 %v1570, %v1580
        %s1585 = sld [smem:[#allocation4 + $0xc]]
        %v1586 = vstv %s1585
        %v1587 = vmul.f32 %v1069, %v1586
        %v1588 = vmul.f32 %v1070, %v1586
        %1591 = vrot.lane.b32.xlu0 %v1587, 115
        %v1592 = vpop.permute.xlu0 %1591
        %1593 = vrot.lane.b32.xlu0 %v1588, 115
        %v1594 = vpop.permute.xlu0 %1593
        %v1597 = vadd.f32 %v1583, %v1592
        %v1598 = vadd.f32 %v1584, %v1594
        %s1599 = sld [smem:[#allocation4 + $0x13]]
        %v1600 = vstv %s1599
        %v1601 = vmul.f32 %v1069, %v1600
        %v1602 = vmul.f32 %v1070, %v1600
        %1605 = vrot.lane.b32.xlu0 %v1601, 107
        %v1606 = vpop.permute.xlu0 %1605
        %1607 = vrot.lane.b32.xlu0 %v1602, 107
        %v1608 = vpop.permute.xlu0 %1607
        %v1611 = vadd.f32 %v1597, %v1606
        %v1612 = vadd.f32 %v1598, %v1608
        %s1613 = sld [smem:[#allocation4 + $0x1a]]
        %v1614 = vstv %s1613
        %v1615 = vmul.f32 %v1069, %v1614
        %v1616 = vmul.f32 %v1070, %v1614
        %1619 = vrot.lane.b32.xlu0 %v1615, 99
        %v1620 = vpop.permute.xlu0 %1619
        %1621 = vrot.lane.b32.xlu0 %v1616, 99
        %v1622 = vpop.permute.xlu0 %1621
        %v1625 = vadd.f32 %v1611, %v1620
        %v1626 = vadd.f32 %v1612, %v1622
        %s1627 = sld [smem:[#allocation4 + $0x21]]
        %v1628 = vstv %s1627
        %v1629 = vmul.f32 %v1069, %v1628
        %v1630 = vmul.f32 %v1070, %v1628
        %1633 = vrot.lane.b32.xlu0 %v1629, 91
        %v1634 = vpop.permute.xlu0 %1633
        %1635 = vrot.lane.b32.xlu0 %v1630, 91
        %v1636 = vpop.permute.xlu0 %1635
        %v1639 = vadd.f32 %v1625, %v1634
        %v1640 = vadd.f32 %v1626, %v1636
        %s1641 = sld [smem:[#allocation4 + $0x28]]
        %v1642 = vstv %s1641
        %v1643 = vmul.f32 %v1069, %v1642
        %v1644 = vmul.f32 %v1070, %v1642
        %1647 = vrot.lane.b32.xlu0 %v1643, 83
        %v1648 = vpop.permute.xlu0 %1647
        %1649 = vrot.lane.b32.xlu0 %v1644, 83
        %v1650 = vpop.permute.xlu0 %1649
        %v1653 = vadd.f32 %v1639, %v1648
        %v1654 = vadd.f32 %v1640, %v1650
        %s1655 = sld [smem:[#allocation4 + $0x2f]]
        %v1656 = vstv %s1655
        %v1657 = vmul.f32 %v1069, %v1656
        %v1658 = vmul.f32 %v1070, %v1656
        %1661 = vrot.lane.b32.xlu0 %v1657, 75
        %v1662 = vpop.permute.xlu0 %1661
        %1663 = vrot.lane.b32.xlu0 %v1658, 75
        %v1664 = vpop.permute.xlu0 %1663
        %v1667 = vadd.f32 %v1653, %v1662
        %v1668 = vadd.f32 %v1654, %v1664
        %s1669 = sld [smem:[#allocation4 + $0x6]]
        %v1670 = vstv %s1669
        %v1671 = vmul.f32 %v1087, %v1670
        %v1672 = vmul.f32 %v1088, %v1670
        %1675 = vrot.lane.b32.xlu0 %v1671, 122
        %v1676 = vpop.permute.xlu0 %1675
        %1677 = vrot.lane.b32.xlu0 %v1672, 122
        %v1678 = vpop.permute.xlu0 %1677
        %v1681 = vadd.f32 %v1667, %v1676
        %v1682 = vadd.f32 %v1668, %v1678
        %s1683 = sld [smem:[#allocation4 + $0xd]]
        %v1684 = vstv %s1683
        %v1685 = vmul.f32 %v1087, %v1684
        %v1686 = vmul.f32 %v1088, %v1684
        %1689 = vrot.lane.b32.xlu0 %v1685, 114
        %v1690 = vpop.permute.xlu0 %1689
        %1691 = vrot.lane.b32.xlu0 %v1686, 114
        %v1692 = vpop.permute.xlu0 %1691
        %v1695 = vadd.f32 %v1681, %v1690
        %v1696 = vadd.f32 %v1682, %v1692
        %s1697 = sld [smem:[#allocation4 + $0x14]]
        %v1698 = vstv %s1697
        %v1699 = vmul.f32 %v1087, %v1698
        %v1700 = vmul.f32 %v1088, %v1698
        %1703 = vrot.lane.b32.xlu0 %v1699, 106
        %v1704 = vpop.permute.xlu0 %1703
        %1705 = vrot.lane.b32.xlu0 %v1700, 106
        %v1706 = vpop.permute.xlu0 %1705
        %v1709 = vadd.f32 %v1695, %v1704
        %v1710 = vadd.f32 %v1696, %v1706
        %s1711 = sld [smem:[#allocation4 + $0x1b]]
        %v1712 = vstv %s1711
        %v1713 = vmul.f32 %v1087, %v1712
        %v1714 = vmul.f32 %v1088, %v1712
        %1717 = vrot.lane.b32.xlu0 %v1713, 98
        %v1718 = vpop.permute.xlu0 %1717
        %1719 = vrot.lane.b32.xlu0 %v1714, 98
        %v1720 = vpop.permute.xlu0 %1719
        %v1723 = vadd.f32 %v1709, %v1718
        %v1724 = vadd.f32 %v1710, %v1720
        %s1725 = sld [smem:[#allocation4 + $0x22]]
        %v1726 = vstv %s1725
        %v1727 = vmul.f32 %v1087, %v1726
        %v1728 = vmul.f32 %v1088, %v1726
        %1731 = vrot.lane.b32.xlu0 %v1727, 90
        %v1732 = vpop.permute.xlu0 %1731
        %1733 = vrot.lane.b32.xlu0 %v1728, 90
        %v1734 = vpop.permute.xlu0 %1733
        %v1737 = vadd.f32 %v1723, %v1732
        %v1738 = vadd.f32 %v1724, %v1734
        %s1739 = sld [smem:[#allocation4 + $0x29]]
        %v1740 = vstv %s1739
        %v1741 = vmul.f32 %v1087, %v1740
        %v1742 = vmul.f32 %v1088, %v1740
        %1745 = vrot.lane.b32.xlu0 %v1741, 82
        %v1746 = vpop.permute.xlu0 %1745
        %1747 = vrot.lane.b32.xlu0 %v1742, 82
        %v1748 = vpop.permute.xlu0 %1747
        %v1751 = vadd.f32 %v1737, %v1746
        %v1752 = vadd.f32 %v1738, %v1748
        %s1753 = sld [smem:[#allocation4 + $0x30]]
        %v1754 = vstv %s1753
        %v1755 = vmul.f32 %v1087, %v1754
        %v1756 = vmul.f32 %v1088, %v1754
        %1759 = vrot.lane.b32.xlu0 %v1755, 74
        %v1760 = vpop.permute.xlu0 %1759
        %1761 = vrot.lane.b32.xlu0 %v1756, 74
        %v1762 = vpop.permute.xlu0 %1761
        %v1765 = vadd.f32 %v1751, %v1760
        %v1766 = vadd.f32 %v1752, %v1762
        %s1767 = sld [smem:[#allocation6 + $0x1]]
        %v1768 = vstv %s1767
        %v1769 = vadd.f32 %v1765, %v1768
        %v1770 = vadd.f32 %v1766, %v1768
        %v1771 = vxor.u32 %v1769, 2147483648
        %v1772 = vxor.u32 %v1770, 2147483648
        %v1773 = vmul.f32 %v1771, 1.442695
        %v1774 = vpow.pop %v1773
        %v1775 = vmul.f32 %v1772, 1.442695
        %v1776 = vpow.pop %v1775
        %v1777 = vadd.f32 %v1774, 1.0
        %v1778 = vadd.f32 %v1776, 1.0
        %v1779 = vrcp.pop %v1777
        %v1780 = vmul.f32 1.0, %v1779
        %v1781 = vrcp.pop %v1778
        %v1782 = vmul.f32 1.0, %v1781
        %vm1783 = vcmask 523264
        %v1784 = vsel %vm1783, %v1780, 0.0
        %1785 = vadd.xlane.f32.xlu0 %v1784
        %v1786 = vpop.xlane.xlu0 %1785
        %v1787 = vsel %vm1783, %v1782, 0.0
        %1788 = vadd.xlane.f32.xlu0 %v1787
        %v1789 = vpop.xlane.xlu0 %1788
        %v1790 = vmul.f32 %v1786, 0.015625
        %v1791 = vmul.f32 %v1789, 0.015625
        %v1792 = vld [vmem:[%s5] sm:$0xff]
        %v1793 = vld [vmem:[%s5 + $0x8] sm:$0xff]
        %v1794 = vmul.f32 %v1792, %v1790
        %v1795 = vmul.f32 %v1793, %v1791
        %vm1796 = vcmask 130048
        %v1797 = vsel %vm1796, %v1794, 0.0
        %v1798 = vsel %vm1796, %v1795, 0.0
        %v1799 = vadd.f32 %v1797, %v1798
        %v1800 = vrot.slane %v1799, 4
        %v1801 = vadd.f32 %v1799, %v1800
        %v1802 = vrot.slane %v1801, 2
        %v1803 = vadd.f32 %v1801, %v1802
        %v1804 = vrot.slane %v1803, 1
        %v1805 = vadd.f32 %v1803, %v1804
        %v1806 = vmax.f32 %v1805, 0.0
        %v1807 = vld [vmem:[%s6] sm:$0xff]
        %v1808 = vld [vmem:[%s6 + $0x8] sm:$0xff]
        %v1809 = vmul.f32 %v1807, %v1806
        %v1810 = vmul.f32 %v1808, %v1806
        %v1811 = vsel %vm1796, %v1809, 0.0
        %1812 = vadd.xlane.f32.xlu0 %v1811
        %v1813 = vpop.xlane.xlu0 %1812
        %v1814 = vsel %vm1796, %v1810, 0.0
        %1815 = vadd.xlane.f32.xlu0 %v1814
        %v1816 = vpop.xlane.xlu0 %1815
        %v1817 = vxor.u32 %v1813, 2147483648
        %v1818 = vxor.u32 %v1816, 2147483648
        %v1819 = vmul.f32 %v1817, 1.442695
        %v1820 = vpow.pop %v1819
        %v1821 = vmul.f32 %v1818, 1.442695
        %v1822 = vpow.pop %v1821
        %v1823 = vadd.f32 %v1820, 1.0
        %v1824 = vadd.f32 %v1822, 1.0
        %v1825 = vrcp.pop %v1823
        %v1826 = vmul.f32 1.0, %v1825
        %v1827 = vrcp.pop %v1824
        %v1828 = vmul.f32 1.0, %v1827
        %v1829 = vmul.f32 %v1780, %v1826
        %v1830 = vmul.f32 %v1782, %v1828
        %1831 = vst.msk [vmem:[%s317] sm:$0xff] %vm1783, %v1829
        %1832 = vst.msk [vmem:[%s317 + $0x8] sm:$0xff] %vm1783, %v1830
        %p1833 = scmp.lt.s32.totalorder %s20, 1
        %s1834 = scalar_select %p1833, %s20, 1
        %s1835 = smul.addr %s1834, 2
        %s1836 = smul.addr %s1835, 8
        %s1837 = scalar_lea.vmem %s7, %s1836
        // Predicated region
        $region61: #{spatial_temporal_attention.1} parent=47 // pred_check
          %p1838 = pneg %p190
        $region62: #{spatial_temporal_attention.1} parent=47 // pred_check_branch
          %1840 = sbr.rel (%p1838) target = $region64
        $region63: #{spatial_temporal_attention.1} parent=47 // pred_region
          _
        $region64: #{spatial_temporal_attention.1} parent=47 // pred_fallthru
          _
      $region48: #{spatial_temporal_attention.1} parent=5 // pred_fallthru
        _
      %p1841 = scmp.le.s32.totalorder 2, %s15
      // Predicated region
      $region65: #{spatial_temporal_attention.1} parent=5 // pred_check
        %p1842 = pneg %p1841
      $region66: #{spatial_temporal_attention.1} parent=5 // pred_check_branch
        %1844 = sbr.rel (%p1842) target = $region68
      $region67: #{spatial_temporal_attention.1} parent=5 // pred_region
        %s1845 = ssub.s32 %s15, 2
        // Predicated region
        $region69: #{spatial_temporal_attention.1} parent=67 // pred_check
          %p1846 = pneg %p196
        $region70: #{spatial_temporal_attention.1} parent=67 // pred_check_branch
          %1848 = sbr.rel (%p1846) target = $region72
        $region71: #{spatial_temporal_attention.1} parent=67 // pred_region
          %p1849 = scmp.lt.s32.totalorder %s21, 1
          %s1850 = scalar_select %p1849, %s21, 1
          %s1851 = smul.addr %s1850, 2
          %s1852 = smul.addr %s1851, 8
          %s1853 = scalar_lea.vmem %s7, %s1852
        $region72: #{spatial_temporal_attention.1} parent=67 // pred_fallthru
          _
      $region68: #{spatial_temporal_attention.1} parent=5 // pred_fallthru
        _
    $region6: #{spatial_temporal_attention.1} parent=1 // loop_footer
      %s19 = sadd.s32 1, %s15
    $region7: #{spatial_temporal_attention.1} parent=1 // loop_footer_branch
      %14 = sbr.rel target = $region3
    $region8: #{spatial_temporal_attention.1} parent=1 // loop_exit
      _
    %1854 = vsyncpa [#allocation3], 1
    %s1855 = scalar_lea.sflag [#allocation3], 1
    %1856 = vsyncpa %s1855, 1
    %1857 = vsyncpa [#allocation5], 1

</llo_original>
